<compile_context>
chip_gen: v7x
topology: tpu7x:2x2x1
jax: 0.10.0
libtpu: 0.0.40
codegen_flags: <defaults>
</compile_context>

<pallas_src>
import jax
import jax.numpy as jnp
from jax.experimental import pallas as pl
from jax.experimental.pallas import tpu as pltpu

# ----------------------------- configuration -------------------------------
NUM_PARTS = 2                            # cfg['num_parts']
HIDDEN    = 64                           # shared-MLP width of synthetic nets
N_POINTS  = 256                          # points per frame
BATCH     = 2
N_FRAMES  = 3                            # length of the tracked sequence
HEAD_DIM  = NUM_PARTS * 3 + NUM_PARTS    # fused nocs|seg head rows (= 8)
IN_CH     = 4                            # point channels: [x, y, z, 1] (ones row carries folded biases)
SEG0_ROW  = NUM_PARTS * 3                # first seg-logit row inside the head (= 6)

N_TRACKED   = (N_FRAMES - 1) * BATCH     # frames with per-point network work (= 4)
STEPS       = 2                          # grid steps; "parallel" -> both v7x TensorCores get work
FB_PER_STEP = N_TRACKED // STEPS         # frames folded onto the lane axis per step (= 2)
LANES       = FB_PER_STEP * N_POINTS     # matmul lane width per step (= 512)
POOL_LANES  = FB_PER_STEP * HIDDEN       # pooled store lane width (= 128, lane-dense)

assert N_TRACKED % STEPS == 0
assert LANES % 128 == 0 and POOL_LANES % 128 == 0


# ===========================================================================
# Fused kernel: one grid step processes FB_PER_STEP frames folded on lanes.
#   CoordNet MLP -> fused nocs|seg head -> argmax label select ->
#   PartCanonNet feature MLP -> per-frame global max-pool.
# Channels-first: channels on sublanes, (frames*points) on lanes.
# ===========================================================================
def fused_track_kernel(x_ref, wa_ref, wn_ref, wbig_ref, b_ref,
                       head_out_ref, pooled_ref):
    H = HIDDEN
    f32, bf16 = jnp.float32, jnp.bfloat16

    x = x_ref[...]                                    # (4, LANES): rows 0:3 xyz, row 3 ones
    wa = wa_ref[...].astype(bf16)                     # (2H, 4)  [CoordNet L1 ; PartCanon point cols]
    wn8 = wn_ref[...].astype(bf16)                    # (2H, 8)  [part-0 nocs ; part-1 nocs] cols
    w2 = wbig_ref[0:H, :].astype(bf16)                # (H, H)   CoordNet L2
    wh = wbig_ref[H:H + HEAD_DIM, :].astype(bf16)     # (8, H)   fused nocs|seg head
    b2 = b_ref[:, 0:1]                                # (H, 1)   f32 bias (added to f32 accum)
    bh = b_ref[0:HEAD_DIM, 1:2]                       # (8, 1)

    # ---- fused dot #1: CoordNet L1 (rows 0:H) + PartCanonNet point features (rows H:2H) ----
    mm1 = jnp.dot(wa, x.astype(bf16), preferred_element_type=f32)          # (2H, LANES)
    h1 = jnp.maximum(mm1[0:H, :], 0.0)                                     # (H, LANES)
    f_pts = mm1[H:2 * H, :]                           # point-feature term (bias folded on ones row)

    # ---- CoordNet trunk + fused nocs|seg head (bf16 MXU, f32 accumulation) ----
    h2 = jnp.maximum(jnp.dot(w2, h1.astype(bf16), preferred_element_type=f32) + b2, 0.0)
    head = jnp.dot(wh, h2.astype(bf16), preferred_element_type=f32) + bh   # (8, LANES)

    # rows 0:6 -> per-part NOCS (sigmoid - 0.5); rows 6:8 -> raw seg logits.
    row = jax.lax.broadcasted_iota(jnp.int32, head.shape, 0)
    out8 = jnp.where(row < SEG0_ROW, jax.nn.sigmoid(head) - 0.5, head)
    head_out_ref[...] = out8                          # single lane-dense (8, 512) store

    # ---- pred_labels = argmax(seg) + choose_coord_by_label ----
    # NUM_PARTS == 2: label = per-lane compare; the NOCS gather is folded into a
    # per-lane select between the part-0 / part-1 matmul results (ties -> part 0).
    sel_part1 = head[SEG0_ROW + 1:SEG0_ROW + 2, :] > head[SEG0_ROW:SEG0_ROW + 1, :]   # (1, LANES)

    # ---- fused dot #2: part-0 (rows 0:H) and part-1 (rows H:2H) nocs features ----
    mmn = jnp.dot(wn8, out8.astype(bf16), preferred_element_type=f32)      # (2H, LANES)
    f = jnp.maximum(f_pts + jnp.where(sel_part1, mmn[H:2 * H, :], mmn[0:H, :]), 0.0)  # (H, LANES)

    # ---- per-frame global max-pool, packed lane-dense into one (1, 128) row ----
    pooled_ref[...] = jnp.concatenate(
        [jnp.max(f[:, i * N_POINTS:(i + 1) * N_POINTS], axis=1)[None, :]
         for i in range(FB_PER_STEP)], axis=1)        # (1, FB_PER_STEP * HIDDEN)


def fused_track_networks(x4, net_params):
    """x4: (STEPS, 4, LANES) channels-first points (FB_PER_STEP frames per step on lanes).

    Returns head_out (STEPS, 8, LANES) [rows 0:6 nocs, 6:8 seg logits] and
            pooled   (STEPS, 1, POOL_LANES) PartCanonNet per-frame global features.
    """
    S, C, L = x4.shape
    assert C == IN_CH and L == LANES and S == STEPS
    wa, wn8, w_big, b_pack = net_params

    flops = 2 * S * L * (2 * HIDDEN * IN_CH + HIDDEN * HIDDEN
                         + HEAD_DIM * HIDDEN + 2 * HIDDEN * HEAD_DIM)
    transcendentals = S * HEAD_DIM * L                                      # sigmoid rows
    bytes_accessed = 4 * (S * IN_CH * L + S * HEAD_DIM * L + S * POOL_LANES
                          + wa.size + wn8.size + w_big.size + b_pack.size)

    return pl.pallas_call(
        fused_track_kernel,
        out_shape=(jax.ShapeDtypeStruct((S, HEAD_DIM, L), jnp.float32),
                   jax.ShapeDtypeStruct((S, 1, POOL_LANES), jnp.float32)),
        grid_spec=pltpu.PrefetchScalarGridSpec(
            num_scalar_prefetch=0,
            grid=(S,),                                       # 2 fat steps; frames batched on lanes
            in_specs=[
                pl.BlockSpec((None, IN_CH, L), lambda s: (s, 0, 0)),
                # constant-index parameter blocks: stay resident in VMEM
                pl.BlockSpec(wa.shape, lambda s: (0, 0)),
                pl.BlockSpec(wn8.shape, lambda s: (0, 0)),
                pl.BlockSpec(w_big.shape, lambda s: (0, 0)),
                pl.BlockSpec(b_pack.shape, lambda s: (0, 0)),
            ],
            out_specs=[
                pl.BlockSpec((None, HEAD_DIM, L), lambda s: (s, 0, 0)),
                pl.BlockSpec((None, 1, POOL_LANES), lambda s: (s, 0, 0)),
            ]),
        compiler_params=pltpu.CompilerParams(
            dimension_semantics=("parallel",)),              # v7x: steps split across both cores
        cost_estimate=pl.CostEstimate(flops=int(flops),
                                      transcendentals=int(transcendentals),
                                      bytes_accessed=int(bytes_accessed)),
    )(x4, wa, wn8, w_big, b_pack)


# ------------------------- input / parameter packing ------------------------
def prepare_points(frames_points_ncw):
    """(T, B, 3, N) PyTorch layout -> (STEPS, 4, LANES): xyz rows + ones row.

    FB_PER_STEP frames are folded onto the lane axis; no zero channels are
    shipped through HBM.  One XLA transpose/reshape for the whole sequence."""
    T, B, _, N = frames_points_ncw.shape
    pts = frames_points_ncw[1:].reshape(STEPS, FB_PER_STEP, 3, N)
    pts = jnp.transpose(pts, (0, 2, 1, 3)).reshape(STEPS, 3, FB_PER_STEP * N)
    ones = jnp.ones((STEPS, 1, FB_PER_STEP * N), jnp.float32)
    return jnp.concatenate([pts, ones], axis=1).astype(jnp.float32)


def pack_net_params(w1, b1, w2, b2, wn, bn, ws, bs, wf, bf):
    """Pack channels-last 'natural' params into 4 channels-first blocks."""
    H = HIDDEN
    # (2H, 4): one MXU pass = CoordNet L1 (rows 0:H) + PartCanonNet point cols
    # (rows H:2H); biases b1 / bf folded onto the ones row of the input.
    wa = jnp.zeros((2 * H, IN_CH), jnp.float32)
    wa = wa.at[0:H, 0:3].set(w1.T).at[0:H, 3].set(b1)
    wa = wa.at[H:2 * H, 0:3].set(wf[0:3].T).at[H:2 * H, 3].set(bf)
    # (2H, 8): one MXU pass against the (8, LANES) head output = part-0 nocs
    # features (rows 0:H, cols 0:3) + part-1 (rows H:2H, cols 3:6); seg cols 0.
    wn8 = jnp.zeros((2 * H, HEAD_DIM), jnp.float32)
    wn8 = wn8.at[0:H, 0:3].set(wf[3:6].T)
    wn8 = wn8.at[H:2 * H, 3:6].set(wf[3:6].T)
    # CoordNet L2 + fused nocs|seg head, stacked on sublanes (slices at x8 -> free).
    whead = jnp.concatenate([wn, ws], axis=1).T                        # (8, H)
    w_big = jnp.concatenate([w2.T, whead], axis=0)                     # (H + 8, H)
    b_pack = (jnp.zeros((H, 2), jnp.float32)
              .at[:, 0].set(b2)
              .at[0:HEAD_DIM, 1].set(jnp.concatenate([bn, bs])))       # (H, 2)
    return wa, wn8, w_big, b_pack


def unpack_frames(head_out, pooled):
    """(STEPS, 8, LANES)/(STEPS, 1, POOL_LANES) -> per-frame (F, 8, N)/(F, H)."""
    F = N_TRACKED
    head_f = (head_out.reshape(STEPS, HEAD_DIM, FB_PER_STEP, N_POINTS)
              .transpose(0, 2, 1, 3).reshape(F, HEAD_DIM, N_POINTS))
    pooled_f = pooled.reshape(F, HIDDEN)
    return head_f, pooled_f


# ----------------------------- pose head (XLA) ------------------------------
def rot6d_to_matrix(x6):
    """6D rotation representation -> rotation matrix via Gram-Schmidt."""
    a1, a2 = x6[..., 0:3], x6[..., 3:6]
    b1 = a1 / (jnp.linalg.norm(a1, axis=-1, keepdims=True) + 1e-8)
    a2 = a2 - jnp.sum(b1 * a2, axis=-1, keepdims=True) * b1
    b2 = a2 / (jnp.linalg.norm(a2, axis=-1, keepdims=True) + 1e-8)
    b3 = jnp.cross(b1, b2)
    return jnp.stack([b1, b2, b3], axis=-1)                            # (..., 3, 3)


def pose_head(pooled, head_params, last_pose):
    """Small FC heads producing a pose update relative to the last pose."""
    # TODO(synk): original PartCanonNet pose regressor unavailable; synthesized
    #             as a pooled-feature delta applied to last_pose.
    wr, wt, wscl = head_params
    B = pooled.shape[0]
    rot6_bias = jnp.tile(jnp.array([1., 0., 0., 0., 1., 0.], jnp.float32), (NUM_PARTS,))
    rot6 = (pooled @ wr) * 0.1 + rot6_bias                             # (B, P*6)
    dt = (pooled @ wt) * 0.01                                          # (B, P*3)
    ds = jnp.tanh(pooled @ wscl) * 0.05                                # (B, P)

    r_delta = rot6d_to_matrix(rot6.reshape(B, NUM_PARTS, 6))           # (B, P, 3, 3)
    rotation = jnp.einsum('bpij,bpjk->bpik', r_delta, last_pose['rotation'])
    translation = last_pose['translation'] + dt.reshape(B, NUM_PARTS, 3, 1)
    scale = last_pose['scale'] * (1.0 + ds)
    return {'rotation': rotation, 'translation': translation, 'scale': scale}


# ---------------------- EvalTrackModel.forward analogue ---------------------
def eval_track_forward(frames_points_ncw, gt_part_init, net_params, head_params):
    """Mirrors EvalTrackModel.forward (gt_init=True, nocs_otf=False, save=False)."""
    T, B, _, N = frames_points_ncw.shape

    # All per-point network work is frame-independent (only the pose head forms
    # a recurrence) -> one pallas_call over 2 fat, frame-batched grid steps.
    x4 = prepare_points(frames_points_ncw)                              # (STEPS, 4, LANES)
    head_out, pooled = fused_track_networks(x4, net_params)
    head_f, pooled_f = unpack_frames(head_out, pooled)                  # (F,8,N), (F,H)

    nocs_all = head_f[:, :NUM_PARTS * 3, :].reshape(T - 1, B, NUM_PARTS * 3, N)
    seg_all = head_f[:, NUM_PARTS * 3:, :].reshape(T - 1, B, NUM_PARTS, N)
    pooled_f = pooled_f.reshape(T - 1, B, HIDDEN)

    pred_poses = [gt_part_init]            # frame 0: gt initialization (gt_init=True)
    npcs_pred = [None]
    # TODO(synk): add_noise_to_part_dof / crop_pose override skipped -- the perturbed
    #             pose is never consumed downstream in the reference forward.
    # TODO(synk): track_cfg['gt_label'] / nocs2d label override and pred_label_conf
    #             bookkeeping not modeled (labels come from the in-kernel argmax select).
    for i in range(1, T):
        npcs_pred.append({'nocs': nocs_all[i - 1], 'seg': seg_all[i - 1]})
        # sequential pose recurrence on the tiny (B, HIDDEN) pooled features
        pred_poses.append(pose_head(pooled_f[i - 1], head_params, pred_poses[-1]))

    return {'poses': pred_poses, 'npcs_pred': npcs_pred}


# ------------------------------ param init ----------------------------------
def _init_linear(key, fan_in, fan_out, bias_scale=0.01):
    kw, kb = jax.random.split(key)
    w = jax.random.normal(kw, (fan_in, fan_out), jnp.float32) * (fan_in ** -0.5)
    b = jax.random.normal(kb, (fan_out,), jnp.float32) * bias_scale
    return w, b


def make_params(key):
    ks = jax.random.split(key, 8)
    # CoordNet: 3 -> H -> H -> {P*3 nocs, P seg}   (channels-last "natural" params)
    w1, b1 = _init_linear(ks[0], 3, HIDDEN)
    w2, b2 = _init_linear(ks[1], HIDDEN, HIDDEN)
    wn, bn = _init_linear(ks[2], HIDDEN, NUM_PARTS * 3)
    ws, bs = _init_linear(ks[3], HIDDEN, NUM_PARTS)
    # PartCanonNet feature MLP: [points ; picked nocs] (6) -> H
    wf, bf = _init_linear(ks[4], 6, HIDDEN)
    raw_params = (w1, b1, w2, b2, wn, bn, ws, bs, wf, bf)
    net_params = pack_net_params(*raw_params)
    # pose heads
    wr = jax.random.normal(ks[5], (HIDDEN, NUM_PARTS * 6), jnp.float32) * (HIDDEN ** -0.5)
    wt = jax.random.normal(ks[6], (HIDDEN, NUM_PARTS * 3), jnp.float32) * (HIDDEN ** -0.5)
    wscl = jax.random.normal(ks[7], (HIDDEN, NUM_PARTS), jnp.float32) * (HIDDEN ** -0.5)
    head_params = (wr, wt, wscl)
    return raw_params, net_params, head_params


# ---------------------- pure-jnp reference check -----------------------------
def check_fused_kernel(frames_points_ncw, raw_params, head_f, pooled_f):
    """Numerically validate the fused kernel (bf16 MXU / f32 accum) against f32 jnp."""
    (w1, b1, w2, b2, wn, bn, ws, bs, wf, bf) = raw_params
    T, B, _, N = frames_points_ncw.shape
    pts = jnp.transpose(frames_points_ncw[1:], (0, 1, 3, 2)).reshape(-1, N, 3)   # (F, N, 3)
    h = jnp.maximum(pts @ w1 + b1, 0.0)
    h = jnp.maximum(h @ w2 + b2, 0.0)
    nocs = jax.nn.sigmoid(h @ wn + bn) - 0.5                                      # (F, N, 6)
    seg = h @ ws + bs                                                             # (F, N, 2)
    head_ref = jnp.transpose(jnp.concatenate([nocs, seg], axis=-1), (0, 2, 1))    # (F, 8, N)
    assert jnp.allclose(head_f, head_ref, atol=2e-2, rtol=2e-2), "CoordNet path mismatch"

    # PartCanonNet path checked with the kernel's own nocs / labels so numerically
    # tied argmax points cannot flip the comparison.
    nocs_k = jnp.transpose(head_f[:, 0:NUM_PARTS * 3, :], (0, 2, 1))              # (F, N, 6)
    lab1 = (head_f[:, SEG0_ROW + 1, :] > head_f[:, SEG0_ROW, :])[..., None]       # (F, N, 1)
    nocs_sel = jnp.where(lab1, nocs_k[:, :, 3:6], nocs_k[:, :, 0:3])
    feat = jnp.concatenate([pts, nocs_sel], axis=-1)                              # (F, N, 6)
    f = jnp.maximum(feat @ wf + bf, 0.0)
    pooled_ref = jnp.max(f, axis=1)                                               # (F, H)
    assert jnp.allclose(pooled_f, pooled_ref, atol=2e-2, rtol=2e-2), "PartCanonNet path mismatch"


# --------------------------------- main --------------------------------------
if __name__ == "__main__":
    key = jax.random.PRNGKey(0)
    k_pts, k_par = jax.random.split(key)

    # points in the PyTorch convention (T, B, 3, N)
    frames_points = jax.random.normal(
        k_pts, (N_FRAMES, BATCH, 3, N_POINTS), jnp.float32) * 0.1

    # frame-0 gt pose (identity; plays the role of feed_dict[0]['gt_part'])
    gt_part_init = {
        'rotation': jnp.broadcast_to(jnp.eye(3, dtype=jnp.float32),
                                     (BATCH, NUM_PARTS, 3, 3)),
        'translation': jnp.zeros((BATCH, NUM_PARTS, 3, 1), jnp.float32),
        'scale': jnp.ones((BATCH, NUM_PARTS), jnp.float32),
    }

    raw_params, net_params, head_params = make_params(k_par)

    # --- fused-kernel numerical check against a pure-jnp reference ---
    x4 = prepare_points(frames_points)
    head_out, pooled = fused_track_networks(x4, net_params)
    head_f, pooled_f = unpack_frames(head_out, pooled)
    check_fused_kernel(frames_points, raw_params, head_f, pooled_f)

    # --- full tracking forward: one Pallas launch + tiny pose recurrence ---
    forward = jax.jit(eval_track_forward)
    pred_dict = forward(frames_points, gt_part_init, net_params, head_params)

    last_pose = pred_dict['poses'][-1]
    last_npcs = pred_dict['npcs_pred'][-1]
    assert last_pose['rotation'].shape == (BATCH, NUM_PARTS, 3, 3)
    assert last_pose['translation'].shape == (BATCH, NUM_PARTS, 3, 1)
    assert last_pose['scale'].shape == (BATCH, NUM_PARTS)
    assert last_npcs['nocs'].shape == (BATCH, NUM_PARTS * 3, N_POINTS)
    assert last_npcs['seg'].shape == (BATCH, NUM_PARTS, N_POINTS)

    jax.block_until_ready(last_pose['rotation'])
    jax.block_until_ready(last_npcs['nocs'])
    print("KERNEL_OK")
</pallas_src>

<mosaic_0001>
module attributes {stable_mosaic.version = 11 : i64} {
  func.func @fused_track_kernel(%arg0: i32, %arg1: memref<1x4x512xf32, #tpu.memory_space<vmem>>, %arg2: memref<128x4xf32, #tpu.memory_space<vmem>>, %arg3: memref<128x8xf32, #tpu.memory_space<vmem>>, %arg4: memref<72x64xf32, #tpu.memory_space<vmem>>, %arg5: memref<64x2xf32, #tpu.memory_space<vmem>>, %arg6: memref<1x8x512xf32, #tpu.memory_space<vmem>>, %arg7: memref<1x1x128xf32, #tpu.memory_space<vmem>>) attributes {dimension_semantics = [#tpu.dimension_semantics<parallel>], iteration_bounds = array<i64: 2>, scalar_prefetch = 0 : i64, scratch_operands = 0 : i64, tpu.core_type = #tpu.core_type<tc>, window_params = [{transform_indices = @transform_0, window_bounds = array<i64: 1, 4, 512>}, {pipeline_mode = #tpu.pipeline_mode<synchronous>, transform_indices = @transform_1, window_bounds = array<i64: 128, 4>}, {pipeline_mode = #tpu.pipeline_mode<synchronous>, transform_indices = @transform_2, window_bounds = array<i64: 128, 8>}, {pipeline_mode = #tpu.pipeline_mode<synchronous>, transform_indices = @transform_3, window_bounds = array<i64: 72, 64>}, {pipeline_mode = #tpu.pipeline_mode<synchronous>, transform_indices = @transform_4, window_bounds = array<i64: 64, 2>}, {transform_indices = @transform_5, window_bounds = array<i64: 1, 8, 512>}, {transform_indices = @transform_6, window_bounds = array<i64: 1, 1, 128>}]} {
    %c0 = arith.constant 0 : index
    %c0_0 = arith.constant 0 : index
    %c0_1 = arith.constant 0 : index
    %0 = vector.load %arg1[%c0, %c0_0, %c0_1] : memref<1x4x512xf32, #tpu.memory_space<vmem>>, vector<1x4x512xf32>
    %1 = vector.shape_cast %0 : vector<1x4x512xf32> to vector<4x512xf32>
    %c0_2 = arith.constant 0 : index
    %c0_3 = arith.constant 0 : index
    %2 = vector.load %arg2[%c0_2, %c0_3] : memref<128x4xf32, #tpu.memory_space<vmem>>, vector<128x4xf32>
    %3 = arith.truncf %2 : vector<128x4xf32> to vector<128x4xbf16>
    %c0_4 = arith.constant 0 : index
    %c0_5 = arith.constant 0 : index
    %4 = vector.load %arg3[%c0_4, %c0_5] : memref<128x8xf32, #tpu.memory_space<vmem>>, vector<128x8xf32>
    %5 = arith.truncf %4 : vector<128x8xf32> to vector<128x8xbf16>
    %c0_6 = arith.constant 0 : index
    %c0_7 = arith.constant 0 : index
    %6 = vector.load %arg4[%c0_6, %c0_7] : memref<72x64xf32, #tpu.memory_space<vmem>>, vector<64x64xf32>
    %7 = arith.truncf %6 : vector<64x64xf32> to vector<64x64xbf16>
    %c64 = arith.constant 64 : index
    %c0_8 = arith.constant 0 : index
    %8 = vector.load %arg4[%c64, %c0_8] : memref<72x64xf32, #tpu.memory_space<vmem>>, vector<8x64xf32>
    %9 = arith.truncf %8 : vector<8x64xf32> to vector<8x64xbf16>
    %c0_9 = arith.constant 0 : index
    %c0_10 = arith.constant 0 : index
    %10 = vector.load %arg5[%c0_9, %c0_10] : memref<64x2xf32, #tpu.memory_space<vmem>>, vector<64x1xf32>
    %c0_11 = arith.constant 0 : index
    %c1 = arith.constant 1 : index
    %11 = vector.load %arg5[%c0_11, %c1] : memref<64x2xf32, #tpu.memory_space<vmem>>, vector<8x1xf32>
    %12 = arith.truncf %1 : vector<4x512xf32> to vector<4x512xbf16>
    %cst = arith.constant dense<0.000000e+00> : vector<128x512xf32>
    %13 = tpu.matmul %3, %12, %cst {dimension_numbers = #tpu.dot_dimension_numbers<[1], [0], [0], [1], [0, 0, 1, 1], [], []>} : vector<128x4xbf16>, vector<4x512xbf16>, vector<128x512xf32> -> vector<128x512xf32>
    %14 = vector.extract_strided_slice %13 {offsets = [0, 0], sizes = [64, 512], strides = [1, 1]} : vector<128x512xf32> to vector<64x512xf32>
    %cst_12 = arith.constant 0.000000e+00 : f32
    %15 = vector.broadcast %cst_12 : f32 to vector<64x512xf32>
    %16 = arith.maximumf %14, %15 : vector<64x512xf32>
    %17 = vector.extract_strided_slice %13 {offsets = [64, 0], sizes = [64, 512], strides = [1, 1]} : vector<128x512xf32> to vector<64x512xf32>
    %18 = arith.truncf %16 : vector<64x512xf32> to vector<64x512xbf16>
    %cst_13 = arith.constant dense<0.000000e+00> : vector<64x512xf32>
    %19 = tpu.matmul %7, %18, %cst_13 {dimension_numbers = #tpu.dot_dimension_numbers<[1], [0], [0], [1], [0, 0, 1, 1], [], []>} : vector<64x64xbf16>, vector<64x512xbf16>, vector<64x512xf32> -> vector<64x512xf32>
    %20 = vector.broadcast %10 : vector<64x1xf32> to vector<64x512xf32>
    %21 = arith.addf %19, %20 : vector<64x512xf32>
    %cst_14 = arith.constant 0.000000e+00 : f32
    %22 = vector.broadcast %cst_14 : f32 to vector<64x512xf32>
    %23 = arith.maximumf %21, %22 : vector<64x512xf32>
    %24 = arith.truncf %23 : vector<64x512xf32> to vector<64x512xbf16>
    %cst_15 = arith.constant dense<0.000000e+00> : vector<8x512xf32>
    %25 = tpu.matmul %9, %24, %cst_15 {dimension_numbers = #tpu.dot_dimension_numbers<[1], [0], [0], [1], [0, 0, 1, 1], [], []>} : vector<8x64xbf16>, vector<64x512xbf16>, vector<8x512xf32> -> vector<8x512xf32>
    %26 = vector.broadcast %11 : vector<8x1xf32> to vector<8x512xf32>
    %27 = arith.addf %25, %26 : vector<8x512xf32>
    %28 = tpu.iota {dimensions = array<i32: 0>} : vector<8x512xi32>
    %c6_i32 = arith.constant 6 : i32
    %29 = vector.broadcast %c6_i32 : i32 to vector<8x512xi32>
    %30 = arith.cmpi slt, %28, %29 : vector<8x512xi32>
    %31 = arith.negf %27 : vector<8x512xf32>
    %32 = math.exp %31 : vector<8x512xf32>
    %cst_16 = arith.constant 1.000000e+00 : f32
    %33 = vector.broadcast %cst_16 : f32 to vector<8x512xf32>
    %34 = arith.addf %33, %32 : vector<8x512xf32>
    %35 = arith.divf %33, %34 : vector<8x512xf32>
    %cst_17 = arith.constant 5.000000e-01 : f32
    %36 = vector.broadcast %cst_17 : f32 to vector<8x512xf32>
    %37 = arith.subf %35, %36 : vector<8x512xf32>
    %38 = arith.select %30, %37, %27 : vector<8x512xi1>, vector<8x512xf32>
    %c0_18 = arith.constant 0 : index
    %c0_19 = arith.constant 0 : index
    %c0_20 = arith.constant 0 : index
    %39 = vector.load %arg6[%c0_18, %c0_19, %c0_20] : memref<1x8x512xf32, #tpu.memory_space<vmem>>, vector<1x8x512xf32>
    %40 = vector.shape_cast %39 : vector<1x8x512xf32> to vector<8x512xf32>
    %41 = vector.shape_cast %38 : vector<8x512xf32> to vector<1x8x512xf32>
    tpu.vector_store %arg6[%c0_18, %c0_19, %c0_20], %41 {strides = array<i32>} : memref<1x8x512xf32, #tpu.memory_space<vmem>>, vector<1x8x512xf32>,
    %42 = vector.extract_strided_slice %27 {offsets = [7, 0], sizes = [1, 512], strides = [1, 1]} : vector<8x512xf32> to vector<1x512xf32>
    %43 = vector.extract_strided_slice %27 {offsets = [6, 0], sizes = [1, 512], strides = [1, 1]} : vector<8x512xf32> to vector<1x512xf32>
    %44 = arith.cmpf ogt, %42, %43 : vector<1x512xf32>
    %45 = arith.truncf %38 : vector<8x512xf32> to vector<8x512xbf16>
    %cst_21 = arith.constant dense<0.000000e+00> : vector<128x512xf32>
    %46 = tpu.matmul %5, %45, %cst_21 {dimension_numbers = #tpu.dot_dimension_numbers<[1], [0], [0], [1], [0, 0, 1, 1], [], []>} : vector<128x8xbf16>, vector<8x512xbf16>, vector<128x512xf32> -> vector<128x512xf32>
    %47 = vector.extract_strided_slice %46 {offsets = [64, 0], sizes = [64, 512], strides = [1, 1]} : vector<128x512xf32> to vector<64x512xf32>
    %48 = vector.extract_strided_slice %46 {offsets = [0, 0], sizes = [64, 512], strides = [1, 1]} : vector<128x512xf32> to vector<64x512xf32>
    %49 = vector.shape_cast %44 : vector<1x512xi1> to vector<1x512xi1>
    %50 = vector.broadcast %49 : vector<1x512xi1> to vector<64x512xi1>
    %51 = arith.select %50, %47, %48 : vector<64x512xi1>, vector<64x512xf32>
    %52 = arith.addf %17, %51 : vector<64x512xf32>
    %cst_22 = arith.constant 0.000000e+00 : f32
    %53 = vector.broadcast %cst_22 : f32 to vector<64x512xf32>
    %54 = arith.maximumf %52, %53 : vector<64x512xf32>
    %55 = vector.extract_strided_slice %54 {offsets = [0, 0], sizes = [64, 256], strides = [1, 1]} : vector<64x512xf32> to vector<64x256xf32>
    %cst_23 = arith.constant dense<0xFF800000> : vector<64xf32>
    %56 = vector.multi_reduction <maximumf>, %55, %cst_23 [1] : vector<64x256xf32> to vector<64xf32>
    %57 = vector.shape_cast %56 : vector<64xf32> to vector<1x64xf32>
    %58 = vector.extract_strided_slice %54 {offsets = [0, 256], sizes = [64, 256], strides = [1, 1]} : vector<64x512xf32> to vector<64x256xf32>
    %cst_24 = arith.constant dense<0xFF800000> : vector<64xf32>
    %59 = vector.multi_reduction <maximumf>, %58, %cst_24 [1] : vector<64x256xf32> to vector<64xf32>
    %60 = vector.shape_cast %59 : vector<64xf32> to vector<1x64xf32>
    %61 = tpu.concatenate %57, %60 in 1 : vector<1x64xf32>, vector<1x64xf32> -> vector<1x128xf32>
    %c0_25 = arith.constant 0 : index
    %c0_26 = arith.constant 0 : index
    %c0_27 = arith.constant 0 : index
    %62 = vector.load %arg7[%c0_25, %c0_26, %c0_27] : memref<1x1x128xf32, #tpu.memory_space<vmem>>, vector<1x1x128xf32>
    %63 = vector.shape_cast %62 : vector<1x1x128xf32> to vector<1x128xf32>
    %64 = vector.shape_cast %61 : vector<1x128xf32> to vector<1x1x128xf32>
    tpu.vector_store %arg7[%c0_25, %c0_26, %c0_27], %64 {strides = array<i32>} : memref<1x1x128xf32, #tpu.memory_space<vmem>>, vector<1x1x128xf32>,
    return
  }
  func.func @transform_0(%arg0: i32) -> (i32, i32, i32) {
    %c0_i32 = arith.constant 0 : i32
    %c0_i32_0 = arith.constant 0 : i32
    %c0_i32_1 = arith.constant 0 : i32
    return %arg0, %c0_i32, %c0_i32_0 : i32, i32, i32
  }
  func.func @transform_1(%arg0: i32) -> (i32, i32) {
    %c0_i32 = arith.constant 0 : i32
    %c0_i32_0 = arith.constant 0 : i32
    %c0_i32_1 = arith.constant 0 : i32
    return %c0_i32, %c0_i32_0 : i32, i32
  }
  func.func @transform_2(%arg0: i32) -> (i32, i32) {
    %c0_i32 = arith.constant 0 : i32
    %c0_i32_0 = arith.constant 0 : i32
    %c0_i32_1 = arith.constant 0 : i32
    return %c0_i32, %c0_i32_0 : i32, i32
  }
  func.func @transform_3(%arg0: i32) -> (i32, i32) {
    %c0_i32 = arith.constant 0 : i32
    %c0_i32_0 = arith.constant 0 : i32
    %c0_i32_1 = arith.constant 0 : i32
    return %c0_i32, %c0_i32_0 : i32, i32
  }
  func.func @transform_4(%arg0: i32) -> (i32, i32) {
    %c0_i32 = arith.constant 0 : i32
    %c0_i32_0 = arith.constant 0 : i32
    %c0_i32_1 = arith.constant 0 : i32
    return %c0_i32, %c0_i32_0 : i32, i32
  }
  func.func @transform_5(%arg0: i32) -> (i32, i32, i32) {
    %c0_i32 = arith.constant 0 : i32
    %c0_i32_0 = arith.constant 0 : i32
    %c0_i32_1 = arith.constant 0 : i32
    return %arg0, %c0_i32, %c0_i32_0 : i32, i32, i32
  }
  func.func @transform_6(%arg0: i32) -> (i32, i32, i32) {
    %c0_i32 = arith.constant 0 : i32
    %c0_i32_0 = arith.constant 0 : i32
    %c0_i32_1 = arith.constant 0 : i32
    return %arg0, %c0_i32, %c0_i32_0 : i32, i32, i32
  }
}

</mosaic_0001>

<llo_original>
// kernel: tpu_custom_call.1
$region0: #{tpu_custom_call.1}
  #allocation0 [shape = 'u32[]', space=smem, size = 0x4, offset = 0x4, fixed_abs, tag = 'smem constant byte address 0x4 - core index']
  #allocation1 [shape = 'u32[144,128]{1,0:T(1,128)}', space=vmem, size = 0x12000, scoped, tag = 'internal scratch']
  %s0 = inlined_call_operand.vmem [shape: f32[2,4,512], index: 0, kind: input, shape index: {}]
  %s1 = inlined_call_operand.vmem [shape: f32[128,4], index: 1, kind: input, shape index: {}]
  %s2 = inlined_call_operand.vmem [shape: f32[128,8], index: 2, kind: input, shape index: {}]
  %s3 = inlined_call_operand.vmem [shape: f32[72,64], index: 3, kind: input, shape index: {}]
  %s4 = inlined_call_operand.vmem [shape: f32[64,2], index: 4, kind: input, shape index: {}]
  %s5 = inlined_call_operand.hbm [shape: f32[2,8,512], index: 5, kind: output, shape index: {0}]
  %s6 = inlined_call_operand.hbm [shape: f32[2,1,128], index: 6, kind: output, shape index: {1}]
  %7 = xla_tuple %s5, %s6
  %s8 = sld [smem:[#allocation0]]
  $region61: #{tpu_custom_call.1} parent=0
    _
  %s10 = ssub.s32 1, %s8
  %s11 = scalar_select 0, %s10, %s8
  $region1: #{tpu_custom_call.1} parent=0
    #allocation2 [shape = 'u8[32768]{0}', space=vmem, size = 0x8000, scoped, tag = 'output window, operand 0']
    #allocation3 [shape = 's32[2]{0}', space=sflag, size = 0x8, scoped, tag = 'scoped memory for tpu_custom_call.1']
    #allocation4 [shape = 'u8[1024]{0}', space=vmem, size = 0x400, scoped, tag = 'output window, operand 1']
    #allocation5 [shape = 's32[2]{0}', space=sflag, size = 0x8, scoped, tag = 'scoped memory for tpu_custom_call.1']
    %12 = vsyncpa [#allocation3], 0
    %s13 = scalar_lea.sflag [#allocation3], 1
    %14 = vsyncpa %s13, 0
    %15 = vsyncpa [#allocation5], 0
    %s16 = scalar_lea.sflag [#allocation5], 1
    %17 = vsyncpa %s16, 0
    loop: start=0, step=1, limit=4
    $region2: #{tpu_custom_call.1} parent=1 // loop_pre_header
      _
    $region3: #{tpu_custom_call.1} parent=1 // loop_header
      %s19 = sphi 0, %s23
      %p20 = scmp.ge.s32.totalorder %s19, 4
      %s29 = sphi 0, %s31
      %s32 = sphi 0, %s29
      %s33 = sphi 0, %s32
      %s49 = sphi 0, %s33
      %s53 = sphi 0, %s53
      %s55 = sphi 0, %s53
      %s56 = sphi 0, %s55
      %s70 = sphi 0, %s56
      %s74 = sphi 0, %s74
      %s76 = sphi 0, %s74
      %s77 = sphi 0, %s76
      %s91 = sphi 0, %s77
      %s95 = sphi 0, %s95
      %s97 = sphi 0, %s95
      %s98 = sphi 0, %s97
      %s112 = sphi 0, %s98
      %s116 = sphi 0, %s116
      %s118 = sphi 0, %s116
      %s119 = sphi 0, %s118
      %s133 = sphi 0, %s119
      %s139 = sphi 0, %s141
      %s142 = sphi 0, %s139
      %s143 = sphi 0, %s142
      %s159 = sphi 0, %s143
      %s165 = sphi 0, %s167
      %s168 = sphi 0, %s165
      %s169 = sphi 0, %s168
      %s185 = sphi 0, %s169
    $region4: #{tpu_custom_call.1} parent=1 // loop_header_branch
      %22 = sbr.rel (%p20) target = $region8
    $region5: #{tpu_custom_call.1} parent=1 // loop_body
      %s24 = ssub.s32 %s19, 1
      %s25 = ssub.s32 %s19, 2
      %s26 = sadd.s32 %s19, 1
      %s27 = ssub.s32 %s19, %s26
      %p28 = scmp.eq.s32.totalorder %s27, 0
      %s30 = sadd.s32 %s29, 1
      %s31 = scalar_select %p28, %s29, %s30
      %p34 = pneg %p28
      %p35 = scmp.eq.s32.totalorder %s19, 1
      %p36 = por %p34, %p35
      %p37 = scmp.ne.s32.totalorder %s29, %s32
      %p38 = scmp.eq.s32.totalorder %s19, 0
      %p39 = por %p37, %p38
      %p40 = scmp.ne.s32.totalorder %s29, %s32
      %p41 = scmp.eq.s32.totalorder %s24, 1
      %p42 = por %p40, %p41
      %p43 = scmp.ne.s32.totalorder %s32, %s33
      %p44 = scmp.eq.s32.totalorder %s24, 0
      %p45 = por %p43, %p44
      %p46 = scmp.ne.s32.totalorder %s32, %s33
      %p47 = scmp.eq.s32.totalorder %s25, 1
      %p48 = por %p46, %p47
      %p50 = scmp.ne.s32.totalorder %s33, %s49
      %p51 = scmp.eq.s32.totalorder %s25, 0
      %p52 = por %p50, %p51
      %s54 = sadd.s32 %s53, 1
      %p57 = scmp.eq.s32.totalorder %s19, 1
      %p58 = scmp.ne.s32.totalorder %s53, %s55
      %p59 = scmp.eq.s32.totalorder %s19, 0
      %p60 = por %p58, %p59
      %p61 = scmp.ne.s32.totalorder %s53, %s55
      %p62 = scmp.eq.s32.totalorder %s24, 1
      %p63 = por %p61, %p62
      %p64 = scmp.ne.s32.totalorder %s55, %s56
      %p65 = scmp.eq.s32.totalorder %s24, 0
      %p66 = por %p64, %p65
      %p67 = scmp.ne.s32.totalorder %s55, %s56
      %p68 = scmp.eq.s32.totalorder %s25, 1
      %p69 = por %p67, %p68
      %p71 = scmp.ne.s32.totalorder %s56, %s70
      %p72 = scmp.eq.s32.totalorder %s25, 0
      %p73 = por %p71, %p72
      %s75 = sadd.s32 %s74, 1
      %p78 = scmp.eq.s32.totalorder %s19, 1
      %p79 = scmp.ne.s32.totalorder %s74, %s76
      %p80 = scmp.eq.s32.totalorder %s19, 0
      %p81 = por %p79, %p80
      %p82 = scmp.ne.s32.totalorder %s74, %s76
      %p83 = scmp.eq.s32.totalorder %s24, 1
      %p84 = por %p82, %p83
      %p85 = scmp.ne.s32.totalorder %s76, %s77
      %p86 = scmp.eq.s32.totalorder %s24, 0
      %p87 = por %p85, %p86
      %p88 = scmp.ne.s32.totalorder %s76, %s77
      %p89 = scmp.eq.s32.totalorder %s25, 1
      %p90 = por %p88, %p89
      %p92 = scmp.ne.s32.totalorder %s77, %s91
      %p93 = scmp.eq.s32.totalorder %s25, 0
      %p94 = por %p92, %p93
      %s96 = sadd.s32 %s95, 1
      %p99 = scmp.eq.s32.totalorder %s19, 1
      %p100 = scmp.ne.s32.totalorder %s95, %s97
      %p101 = scmp.eq.s32.totalorder %s19, 0
      %p102 = por %p100, %p101
      %p103 = scmp.ne.s32.totalorder %s95, %s97
      %p104 = scmp.eq.s32.totalorder %s24, 1
      %p105 = por %p103, %p104
      %p106 = scmp.ne.s32.totalorder %s97, %s98
      %p107 = scmp.eq.s32.totalorder %s24, 0
      %p108 = por %p106, %p107
      %p109 = scmp.ne.s32.totalorder %s97, %s98
      %p110 = scmp.eq.s32.totalorder %s25, 1
      %p111 = por %p109, %p110
      %p113 = scmp.ne.s32.totalorder %s98, %s112
      %p114 = scmp.eq.s32.totalorder %s25, 0
      %p115 = por %p113, %p114
      %s117 = sadd.s32 %s116, 1
      %p120 = scmp.eq.s32.totalorder %s19, 1
      %p121 = scmp.ne.s32.totalorder %s116, %s118
      %p122 = scmp.eq.s32.totalorder %s19, 0
      %p123 = por %p121, %p122
      %p124 = scmp.ne.s32.totalorder %s116, %s118
      %p125 = scmp.eq.s32.totalorder %s24, 1
      %p126 = por %p124, %p125
      %p127 = scmp.ne.s32.totalorder %s118, %s119
      %p128 = scmp.eq.s32.totalorder %s24, 0
      %p129 = por %p127, %p128
      %p130 = scmp.ne.s32.totalorder %s118, %s119
      %p131 = scmp.eq.s32.totalorder %s25, 1
      %p132 = por %p130, %p131
      %p134 = scmp.ne.s32.totalorder %s119, %s133
      %p135 = scmp.eq.s32.totalorder %s25, 0
      %p136 = por %p134, %p135
      %s137 = ssub.s32 %s19, %s26
      %p138 = scmp.eq.s32.totalorder %s137, 0
      %s140 = sadd.s32 %s139, 1
      %s141 = scalar_select %p138, %s139, %s140
      %p144 = pneg %p138
      %p145 = scmp.eq.s32.totalorder %s19, 1
      %p146 = por %p144, %p145
      %p147 = scmp.ne.s32.totalorder %s139, %s142
      %p148 = scmp.eq.s32.totalorder %s19, 0
      %p149 = por %p147, %p148
      %p150 = scmp.ne.s32.totalorder %s139, %s142
      %p151 = scmp.eq.s32.totalorder %s24, 1
      %p152 = por %p150, %p151
      %p153 = scmp.ne.s32.totalorder %s142, %s143
      %p154 = scmp.eq.s32.totalorder %s24, 0
      %p155 = por %p153, %p154
      %p156 = scmp.ne.s32.totalorder %s142, %s143
      %p157 = scmp.eq.s32.totalorder %s25, 1
      %p158 = por %p156, %p157
      %p160 = scmp.ne.s32.totalorder %s143, %s159
      %p161 = scmp.eq.s32.totalorder %s25, 0
      %p162 = por %p160, %p161
      %s163 = ssub.s32 %s19, %s26
      %p164 = scmp.eq.s32.totalorder %s163, 0
      %s166 = sadd.s32 %s165, 1
      %s167 = scalar_select %p164, %s165, %s166
      %p170 = pneg %p164
      %p171 = scmp.eq.s32.totalorder %s19, 1
      %p172 = por %p170, %p171
      %p173 = scmp.ne.s32.totalorder %s165, %s168
      %p174 = scmp.eq.s32.totalorder %s19, 0
      %p175 = por %p173, %p174
      %p176 = scmp.ne.s32.totalorder %s165, %s168
      %p177 = scmp.eq.s32.totalorder %s24, 1
      %p178 = por %p176, %p177
      %p179 = scmp.ne.s32.totalorder %s168, %s169
      %p180 = scmp.eq.s32.totalorder %s24, 0
      %p181 = por %p179, %p180
      %p182 = scmp.ne.s32.totalorder %s168, %s169
      %p183 = scmp.eq.s32.totalorder %s25, 1
      %p184 = por %p182, %p183
      %p186 = scmp.ne.s32.totalorder %s169, %s185
      %p187 = scmp.eq.s32.totalorder %s25, 0
      %p188 = por %p186, %p187
      %p189 = scmp.le.s32.totalorder 1, %s19
      %p190 = scmp.lt.s32.totalorder %s19, 3
      %p191 = pnand %p189, %p190
      %p192 = pneg %p191
      // Predicated region
      $region9: #{tpu_custom_call.1} parent=5 // pred_check
        _
      $region10: #{tpu_custom_call.1} parent=5 // pred_check_branch
        %194 = sbr.rel (%p191) target = $region12
      $region11: #{tpu_custom_call.1} parent=5 // pred_region
        %s195 = ssub.s32 %s19, 1
        // Predicated region
        $region13: #{tpu_custom_call.1} parent=11 // pred_check
          %p196 = pneg %p66
        $region14: #{tpu_custom_call.1} parent=11 // pred_check_branch
          %198 = sbr.rel (%p196) target = $region16
        $region15: #{tpu_custom_call.1} parent=11 // pred_region
          _
        $region16: #{tpu_custom_call.1} parent=11 // pred_fallthru
          _
        // Predicated region
        $region17: #{tpu_custom_call.1} parent=11 // pred_check
          %p199 = pneg %p87
        $region18: #{tpu_custom_call.1} parent=11 // pred_check_branch
          %201 = sbr.rel (%p199) target = $region20
        $region19: #{tpu_custom_call.1} parent=11 // pred_region
          _
        $region20: #{tpu_custom_call.1} parent=11 // pred_fallthru
          _
        // Predicated region
        $region21: #{tpu_custom_call.1} parent=11 // pred_check
          %p202 = pneg %p108
        $region22: #{tpu_custom_call.1} parent=11 // pred_check_branch
          %204 = sbr.rel (%p202) target = $region24
        $region23: #{tpu_custom_call.1} parent=11 // pred_region
          _
        $region24: #{tpu_custom_call.1} parent=11 // pred_fallthru
          _
        // Predicated region
        $region25: #{tpu_custom_call.1} parent=11 // pred_check
          %p205 = pneg %p129
        $region26: #{tpu_custom_call.1} parent=11 // pred_check_branch
          %207 = sbr.rel (%p205) target = $region28
        $region27: #{tpu_custom_call.1} parent=11 // pred_region
          _
        $region28: #{tpu_custom_call.1} parent=11 // pred_fallthru
          _
      $region12: #{tpu_custom_call.1} parent=5 // pred_fallthru
        _
      %p208 = scmp.lt.s32.totalorder %s19, 2
      // Predicated region
      $region29: #{tpu_custom_call.1} parent=5 // pred_check
        %p209 = pneg %p208
      $region30: #{tpu_custom_call.1} parent=5 // pred_check_branch
        %211 = sbr.rel (%p209) target = $region32
      $region31: #{tpu_custom_call.1} parent=5 // pred_region
        // Predicated region
        $region33: #{tpu_custom_call.1} parent=31 // pred_check
          %p212 = pneg %p39
        $region34: #{tpu_custom_call.1} parent=31 // pred_check_branch
          %214 = sbr.rel (%p212) target = $region36
        $region35: #{tpu_custom_call.1} parent=31 // pred_region
          %p215 = scmp.lt.s32.totalorder %s19, 1
          %s216 = scalar_select %p215, %s19, 1
          %s217 = smul.addr %s216, 4
          %s218 = smul.addr %s217, 4
          %s219 = scalar_lea.vmem %s0, %s218
        $region36: #{tpu_custom_call.1} parent=31 // pred_fallthru
          _
      $region32: #{tpu_custom_call.1} parent=5 // pred_fallthru
        _
      %p220 = scmp.le.s32.totalorder 1, %s19
      %p221 = scmp.lt.s32.totalorder %s19, 3
      %p222 = pnand %p220, %p221
      %p223 = pneg %p222
      // Predicated region
      $region37: #{tpu_custom_call.1} parent=5 // pred_check
        _
      $region38: #{tpu_custom_call.1} parent=5 // pred_check_branch
        %225 = sbr.rel (%p222) target = $region40
      $region39: #{tpu_custom_call.1} parent=5 // pred_region
        %s226 = ssub.s32 %s19, 1
        %p227 = scmp.lt.s32.totalorder %s24, 1
        %s228 = scalar_select %p227, %s24, 1
        %s229 = smul.addr %s228, 4
        %s230 = smul.addr %s229, 4
        %s231 = scalar_lea.vmem %s0, %s230
        %p232 = pneg %p45
        %p233 = pneg %p42
        %p234 = pneg %p66
        %p235 = pneg %p63
        %p236 = pneg %p87
        %p237 = pneg %p84
        %p238 = pneg %p108
        %p239 = pneg %p105
        %p240 = pneg %p129
        %p241 = pneg %p126
        %p242 = pneg %p155
        %p243 = pneg %p152
        %s244 = sand.u32 %s142, 1
        %s245 = scalar_lea.sflag [#allocation3], %s244
        %s246 = sand.u32 %s142, 1
        %s247 = smul.addr %s246, 32
        %s248 = scalar_lea.vmem [#allocation2], %s247
        %p249 = pneg %p181
        %p250 = pneg %p178
        %s251 = sand.u32 %s168, 1
        %s252 = scalar_lea.sflag [#allocation5], %s251
        %s253 = sand.u32 %s168, 1
        %s254 = scalar_lea.vmem [#allocation4], %s253
        %p255 = scmp.lt.s32.totalorder %s24, 1
        %s256 = scalar_select %p255, %s24, 1
        %s257 = smul.addr %s256, 4
        %s258 = smul.addr %s257, 4
        %s259 = scalar_lea.vmem %s0, %s258
        %v261 = vld [vmem:[%s259] sm:$0xff]
        %v262 = vld [vmem:[%s259 + $0x8] sm:$0xff]
        %v263 = vld [vmem:[%s1] sm:$0xff]
        %v264 = vld [vmem:[%s1 + $0x8] sm:$0xff]
        %v265 = vld [vmem:[%s1 + $0x10] sm:$0xff]
        %v266 = vld [vmem:[%s1 + $0x18] sm:$0xff]
        %v267 = vld [vmem:[%s1 + $0x20] sm:$0xff]
        %v268 = vld [vmem:[%s1 + $0x28] sm:$0xff]
        %v269 = vld [vmem:[%s1 + $0x30] sm:$0xff]
        %v270 = vld [vmem:[%s1 + $0x38] sm:$0xff]
        %v271 = vld [vmem:[%s1 + $0x40] sm:$0xff]
        %v272 = vld [vmem:[%s1 + $0x48] sm:$0xff]
        %v273 = vld [vmem:[%s1 + $0x50] sm:$0xff]
        %v274 = vld [vmem:[%s1 + $0x58] sm:$0xff]
        %v275 = vld [vmem:[%s1 + $0x60] sm:$0xff]
        %v276 = vld [vmem:[%s1 + $0x68] sm:$0xff]
        %v277 = vld [vmem:[%s1 + $0x70] sm:$0xff]
        %v278 = vld [vmem:[%s1 + $0x78] sm:$0xff]
        %v279 = vpack.c.bf16 %v264, %v263
        %v280 = vpack.c.bf16 %v266, %v265
        %v281 = vpack.c.bf16 %v268, %v267
        %v282 = vpack.c.bf16 %v270, %v269
        %v283 = vpack.c.bf16 %v272, %v271
        %v284 = vpack.c.bf16 %v274, %v273
        %v285 = vpack.c.bf16 %v276, %v275
        %v286 = vpack.c.bf16 %v278, %v277
        %v287 = vld [vmem:[%s2] sm:$0xff]
        %v288 = vld [vmem:[%s2 + $0x8] sm:$0xff]
        %v289 = vld [vmem:[%s2 + $0x10] sm:$0xff]
        %v290 = vld [vmem:[%s2 + $0x18] sm:$0xff]
        %v291 = vld [vmem:[%s2 + $0x20] sm:$0xff]
        %v292 = vld [vmem:[%s2 + $0x28] sm:$0xff]
        %v293 = vld [vmem:[%s2 + $0x30] sm:$0xff]
        %v294 = vld [vmem:[%s2 + $0x38] sm:$0xff]
        %v295 = vld [vmem:[%s2 + $0x40] sm:$0xff]
        %v296 = vld [vmem:[%s2 + $0x48] sm:$0xff]
        %v297 = vld [vmem:[%s2 + $0x50] sm:$0xff]
        %v298 = vld [vmem:[%s2 + $0x58] sm:$0xff]
        %v299 = vld [vmem:[%s2 + $0x60] sm:$0xff]
        %v300 = vld [vmem:[%s2 + $0x68] sm:$0xff]
        %v301 = vld [vmem:[%s2 + $0x70] sm:$0xff]
        %v302 = vld [vmem:[%s2 + $0x78] sm:$0xff]
        %v303 = vpack.c.bf16 %v288, %v287
        %v304 = vpack.c.bf16 %v290, %v289
        %v305 = vpack.c.bf16 %v292, %v291
        %v306 = vpack.c.bf16 %v294, %v293
        %v307 = vpack.c.bf16 %v296, %v295
        %v308 = vpack.c.bf16 %v298, %v297
        %v309 = vpack.c.bf16 %v300, %v299
        %v310 = vpack.c.bf16 %v302, %v301
        %v311 = vld [vmem:[%s3] sm:$0xff]
        %v312 = vld [vmem:[%s3 + $0x8] sm:$0xff]
        %v313 = vld [vmem:[%s3 + $0x10] sm:$0xff]
        %v314 = vld [vmem:[%s3 + $0x18] sm:$0xff]
        %v315 = vld [vmem:[%s3 + $0x20] sm:$0xff]
        %v316 = vld [vmem:[%s3 + $0x28] sm:$0xff]
        %v317 = vld [vmem:[%s3 + $0x30] sm:$0xff]
        %v318 = vld [vmem:[%s3 + $0x38] sm:$0xff]
        %v319 = vpack.c.bf16 %v312, %v311
        %v320 = vpack.c.bf16 %v314, %v313
        %v321 = vpack.c.bf16 %v316, %v315
        %v322 = vpack.c.bf16 %v318, %v317
        %v323 = vld [vmem:[%s3 + $0x40] sm:$0xff]
        %v324 = vpack.c.bf16 %v323, %v323
        %v325 = vld [vmem:[%s4] sm:$0xff]
        %v326 = vld [vmem:[%s4 + $0x8] sm:$0xff]
        %v327 = vld [vmem:[%s4 + $0x10] sm:$0xff]
        %v328 = vld [vmem:[%s4 + $0x18] sm:$0xff]
        %v329 = vld [vmem:[%s4 + $0x20] sm:$0xff]
        %v330 = vld [vmem:[%s4 + $0x28] sm:$0xff]
        %v331 = vld [vmem:[%s4 + $0x30] sm:$0xff]
        %v332 = vld [vmem:[%s4 + $0x38] sm:$0xff]
        %v335 = vcombine.high %v261, %v261
        %v336 = vcombine.high %v262, %v262
        %v339 = vpack.c.bf16 %v261, %v261
        %v340 = vpack.c.bf16 %v335, %v335
        %v341 = vpack.c.bf16 %v262, %v262
        %v342 = vpack.c.bf16 %v336, %v336
        %vm343 = vcmask 31744
        %v345 = vsel %vm343, %v279, 0
        %v348 = vsel %vm343, %v280, 0
        %v351 = vsel %vm343, %v281, 0
        %v354 = vsel %vm343, %v282, 0
        %v357 = vsel %vm343, %v283, 0
        %v360 = vsel %vm343, %v284, 0
        %v363 = vsel %vm343, %v285, 0
        %v366 = vsel %vm343, %v286, 0
        %vm368 = vcmask 1041408
        %v370 = vsel %vm368, %v339, 0
        %v373 = vsel %vm368, %v340, 0
        %v376 = vsel %vm368, %v341, 0
        %v379 = vsel %vm368, %v342, 0
        %381 = vmatprep.subr.bf16.mxu0 %v373
        %382 = vmatpush1.bf16.msra.mxu0 %v370
        %383 = vmatprep.subr.bf16.mxu0 0
        %384 = vmatpush1.bf16.msra.mxu0 0
        %385 = vmatprep.subr.bf16.mxu0 0
        %386 = vmatpush1.bf16.msra.mxu0 0
        %387 = vmatprep.subr.bf16.mxu0 0
        %388 = vmatpush1.bf16.msra.mxu0 0
        %389 = vmatprep.subr.bf16.mxu0 0
        %390 = vmatpush1.bf16.msra.mxu0 0
        %391 = vmatprep.subr.bf16.mxu0 0
        %392 = vmatpush1.bf16.msra.mxu0 0
        %393 = vmatprep.subr.bf16.mxu0 0
        %394 = vmatpush1.bf16.msra.mxu0 0
        %395 = vmatprep.subr.bf16.mxu0 0
        %396 = vmatpush1.bf16.msra.mxu0 0
        %397 = vmatprep.subr.bf16.mxu0 0
        %398 = vmatpush1.bf16.msra.mxu0 0
        %399 = vmatprep.subr.bf16.mxu0 0
        %400 = vmatpush1.bf16.msra.mxu0 0
        %401 = vmatprep.subr.bf16.mxu0 0
        %402 = vmatpush1.bf16.msra.mxu0 0
        %403 = vmatprep.subr.bf16.mxu0 0
        %404 = vmatpush1.bf16.msra.mxu0 0
        %405 = vmatprep.subr.bf16.mxu0 0
        %406 = vmatpush1.bf16.msra.mxu0 0
        %407 = vmatprep.subr.bf16.mxu0 0
        %408 = vmatpush1.bf16.msra.mxu0 0
        %409 = vmatprep.subr.bf16.mxu0 0
        %410 = vmatpush1.bf16.msra.mxu0 0
        %411 = vmatprep.subr.bf16.mxu0 0
        %412 = vmatpush1.bf16.msra.mxu0 0
        %413 = vmatprep.mubr.bf16.mxu0 0
        %414 = vmatmul.mubr.bf16.gmra.mrb[0].mxu0 %v345
        %v415 = vpop.f32.mrb[0].mxu0
        %v416 = vadd.f32 0.0, %v415
        %v417 = vpop.f32.mrb[0].mxu0
        %v418 = vadd.f32 0.0, %v417
        %v419 = vpop.f32.mrb[0].mxu0
        %v420 = vadd.f32 0.0, %v419
        %v421 = vpop.f32.mrb[0].mxu0
        %v422 = vadd.f32 0.0, %v421
        %423 = vmatprep.mubr.bf16.mxu0 0
        %424 = vmatmul.mubr.bf16.gmra.mrb[0].mxu0 %v348
        %v425 = vpop.f32.mrb[0].mxu0
        %v426 = vadd.f32 0.0, %v425
        %v427 = vpop.f32.mrb[0].mxu0
        %v428 = vadd.f32 0.0, %v427
        %v429 = vpop.f32.mrb[0].mxu0
        %v430 = vadd.f32 0.0, %v429
        %v431 = vpop.f32.mrb[0].mxu0
        %v432 = vadd.f32 0.0, %v431
        %433 = vmatprep.mubr.bf16.mxu0 0
        %434 = vmatmul.mubr.bf16.gmra.mrb[0].mxu0 %v351
        %v435 = vpop.f32.mrb[0].mxu0
        %v436 = vadd.f32 0.0, %v435
        %v437 = vpop.f32.mrb[0].mxu0
        %v438 = vadd.f32 0.0, %v437
        %v439 = vpop.f32.mrb[0].mxu0
        %v440 = vadd.f32 0.0, %v439
        %v441 = vpop.f32.mrb[0].mxu0
        %v442 = vadd.f32 0.0, %v441
        %443 = vmatprep.mubr.bf16.mxu0 0
        %444 = vmatmul.mubr.bf16.gmra.mrb[0].mxu0 %v354
        %v445 = vpop.f32.mrb[0].mxu0
        %v446 = vadd.f32 0.0, %v445
        %v447 = vpop.f32.mrb[0].mxu0
        %v448 = vadd.f32 0.0, %v447
        %v449 = vpop.f32.mrb[0].mxu0
        %v450 = vadd.f32 0.0, %v449
        %v451 = vpop.f32.mrb[0].mxu0
        %v452 = vadd.f32 0.0, %v451
        %453 = vmatprep.mubr.bf16.mxu0 0
        %454 = vmatmul.mubr.bf16.gmra.mrb[0].mxu0 %v357
        %v455 = vpop.f32.mrb[0].mxu0
        %v456 = vadd.f32 0.0, %v455
        %v457 = vpop.f32.mrb[0].mxu0
        %v458 = vadd.f32 0.0, %v457
        %v459 = vpop.f32.mrb[0].mxu0
        %v460 = vadd.f32 0.0, %v459
        %v461 = vpop.f32.mrb[0].mxu0
        %v462 = vadd.f32 0.0, %v461
        %463 = vmatprep.mubr.bf16.mxu0 0
        %464 = vmatmul.mubr.bf16.gmra.mrb[0].mxu0 %v360
        %v465 = vpop.f32.mrb[0].mxu0
        %v466 = vadd.f32 0.0, %v465
        %v467 = vpop.f32.mrb[0].mxu0
        %v468 = vadd.f32 0.0, %v467
        %v469 = vpop.f32.mrb[0].mxu0
        %v470 = vadd.f32 0.0, %v469
        %v471 = vpop.f32.mrb[0].mxu0
        %v472 = vadd.f32 0.0, %v471
        %473 = vmatprep.mubr.bf16.mxu0 0
        %474 = vmatmul.mubr.bf16.gmra.mrb[0].mxu0 %v363
        %v475 = vpop.f32.mrb[0].mxu0
        %v476 = vadd.f32 0.0, %v475
        %v477 = vpop.f32.mrb[0].mxu0
        %v478 = vadd.f32 0.0, %v477
        %v479 = vpop.f32.mrb[0].mxu0
        %v480 = vadd.f32 0.0, %v479
        %v481 = vpop.f32.mrb[0].mxu0
        %v482 = vadd.f32 0.0, %v481
        %483 = vmatprep.mubr.bf16.mxu0 0
        %484 = vmatmul.mubr.bf16.gmra.mrb[0].mxu0 %v366
        %v485 = vpop.f32.mrb[0].mxu0
        %v486 = vadd.f32 0.0, %v485
        %v487 = vpop.f32.mrb[0].mxu0
        %v488 = vadd.f32 0.0, %v487
        %v489 = vpop.f32.mrb[0].mxu0
        %v490 = vadd.f32 0.0, %v489
        %v491 = vpop.f32.mrb[0].mxu0
        %v492 = vadd.f32 0.0, %v491
        %493 = vdwg.mxu0
        %494 = vmatprep.subr.bf16.mxu0 %v379
        %495 = vmatpush1.bf16.msra.mxu0 %v376
        %496 = vmatprep.subr.bf16.mxu0 0
        %497 = vmatpush1.bf16.msra.mxu0 0
        %498 = vmatprep.subr.bf16.mxu0 0
        %499 = vmatpush1.bf16.msra.mxu0 0
        %500 = vmatprep.subr.bf16.mxu0 0
        %501 = vmatpush1.bf16.msra.mxu0 0
        %502 = vmatprep.subr.bf16.mxu0 0
        %503 = vmatpush1.bf16.msra.mxu0 0
        %504 = vmatprep.subr.bf16.mxu0 0
        %505 = vmatpush1.bf16.msra.mxu0 0
        %506 = vmatprep.subr.bf16.mxu0 0
        %507 = vmatpush1.bf16.msra.mxu0 0
        %508 = vmatprep.subr.bf16.mxu0 0
        %509 = vmatpush1.bf16.msra.mxu0 0
        %510 = vmatprep.subr.bf16.mxu0 0
        %511 = vmatpush1.bf16.msra.mxu0 0
        %512 = vmatprep.subr.bf16.mxu0 0
        %513 = vmatpush1.bf16.msra.mxu0 0
        %514 = vmatprep.subr.bf16.mxu0 0
        %515 = vmatpush1.bf16.msra.mxu0 0
        %516 = vmatprep.subr.bf16.mxu0 0
        %517 = vmatpush1.bf16.msra.mxu0 0
        %518 = vmatprep.subr.bf16.mxu0 0
        %519 = vmatpush1.bf16.msra.mxu0 0
        %520 = vmatprep.subr.bf16.mxu0 0
        %521 = vmatpush1.bf16.msra.mxu0 0
        %522 = vmatprep.subr.bf16.mxu0 0
        %523 = vmatpush1.bf16.msra.mxu0 0
        %524 = vmatprep.subr.bf16.mxu0 0
        %525 = vmatpush1.bf16.msra.mxu0 0
        %526 = vmatprep.mubr.bf16.mxu0 0
        %527 = vmatmul.mubr.bf16.gmra.mrb[0].mxu0 %v345
        %v528 = vpop.f32.mrb[0].mxu0
        %v529 = vadd.f32 0.0, %v528
        %v530 = vpop.f32.mrb[0].mxu0
        %v531 = vadd.f32 0.0, %v530
        %v532 = vpop.f32.mrb[0].mxu0
        %v533 = vadd.f32 0.0, %v532
        %v534 = vpop.f32.mrb[0].mxu0
        %v535 = vadd.f32 0.0, %v534
        %536 = vmatprep.mubr.bf16.mxu0 0
        %537 = vmatmul.mubr.bf16.gmra.mrb[0].mxu0 %v348
        %v538 = vpop.f32.mrb[0].mxu0
        %v539 = vadd.f32 0.0, %v538
        %v540 = vpop.f32.mrb[0].mxu0
        %v541 = vadd.f32 0.0, %v540
        %v542 = vpop.f32.mrb[0].mxu0
        %v543 = vadd.f32 0.0, %v542
        %v544 = vpop.f32.mrb[0].mxu0
        %v545 = vadd.f32 0.0, %v544
        %546 = vmatprep.mubr.bf16.mxu0 0
        %547 = vmatmul.mubr.bf16.gmra.mrb[0].mxu0 %v351
        %v548 = vpop.f32.mrb[0].mxu0
        %v549 = vadd.f32 0.0, %v548
        %v550 = vpop.f32.mrb[0].mxu0
        %v551 = vadd.f32 0.0, %v550
        %v552 = vpop.f32.mrb[0].mxu0
        %v553 = vadd.f32 0.0, %v552
        %v554 = vpop.f32.mrb[0].mxu0
        %v555 = vadd.f32 0.0, %v554
        %556 = vmatprep.mubr.bf16.mxu0 0
        %557 = vmatmul.mubr.bf16.gmra.mrb[0].mxu0 %v354
        %v558 = vpop.f32.mrb[0].mxu0
        %v559 = vadd.f32 0.0, %v558
        %v560 = vpop.f32.mrb[0].mxu0
        %v561 = vadd.f32 0.0, %v560
        %v562 = vpop.f32.mrb[0].mxu0
        %v563 = vadd.f32 0.0, %v562
        %v564 = vpop.f32.mrb[0].mxu0
        %v565 = vadd.f32 0.0, %v564
        %566 = vmatprep.mubr.bf16.mxu0 0
        %567 = vmatmul.mubr.bf16.gmra.mrb[0].mxu0 %v357
        %v568 = vpop.f32.mrb[0].mxu0
        %v569 = vadd.f32 0.0, %v568
        %v570 = vpop.f32.mrb[0].mxu0
        %v571 = vadd.f32 0.0, %v570
        %v572 = vpop.f32.mrb[0].mxu0
        %v573 = vadd.f32 0.0, %v572
        %v574 = vpop.f32.mrb[0].mxu0
        %v575 = vadd.f32 0.0, %v574
        %576 = vmatprep.mubr.bf16.mxu0 0
        %577 = vmatmul.mubr.bf16.gmra.mrb[0].mxu0 %v360
        %v578 = vpop.f32.mrb[0].mxu0
        %v579 = vadd.f32 0.0, %v578
        %v580 = vpop.f32.mrb[0].mxu0
        %v581 = vadd.f32 0.0, %v580
        %v582 = vpop.f32.mrb[0].mxu0
        %v583 = vadd.f32 0.0, %v582
        %v584 = vpop.f32.mrb[0].mxu0
        %v585 = vadd.f32 0.0, %v584
        %586 = vmatprep.mubr.bf16.mxu0 0
        %587 = vmatmul.mubr.bf16.gmra.mrb[0].mxu0 %v363
        %v588 = vpop.f32.mrb[0].mxu0
        %v589 = vadd.f32 0.0, %v588
        %v590 = vpop.f32.mrb[0].mxu0
        %v591 = vadd.f32 0.0, %v590
        %v592 = vpop.f32.mrb[0].mxu0
        %v593 = vadd.f32 0.0, %v592
        %v594 = vpop.f32.mrb[0].mxu0
        %v595 = vadd.f32 0.0, %v594
        %596 = vmatprep.mubr.bf16.mxu0 0
        %597 = vmatmul.mubr.bf16.gmra.mrb[0].mxu0 %v366
        %v598 = vpop.f32.mrb[0].mxu0
        %v599 = vadd.f32 0.0, %v598
        %v600 = vpop.f32.mrb[0].mxu0
        %v601 = vadd.f32 0.0, %v600
        %v602 = vpop.f32.mrb[0].mxu0
        %v603 = vadd.f32 0.0, %v602
        %v604 = vpop.f32.mrb[0].mxu0
        %v605 = vadd.f32 0.0, %v604
        %606 = vdwg.mxu0
        %v607 = vmax.f32 %v416, 0.0
        %v608 = vmax.f32 %v418, 0.0
        %v609 = vmax.f32 %v529, 0.0
        %v610 = vmax.f32 %v531, 0.0
        %v611 = vmax.f32 %v420, 0.0
        %v612 = vmax.f32 %v422, 0.0
        %v613 = vmax.f32 %v533, 0.0
        %v614 = vmax.f32 %v535, 0.0
        %v615 = vmax.f32 %v426, 0.0
        %v616 = vmax.f32 %v428, 0.0
        %v617 = vmax.f32 %v539, 0.0
        %v618 = vmax.f32 %v541, 0.0
        %v619 = vmax.f32 %v430, 0.0
        %v620 = vmax.f32 %v432, 0.0
        %v621 = vmax.f32 %v543, 0.0
        %v622 = vmax.f32 %v545, 0.0
        %v623 = vmax.f32 %v436, 0.0
        %v624 = vmax.f32 %v438, 0.0
        %v625 = vmax.f32 %v549, 0.0
        %v626 = vmax.f32 %v551, 0.0
        %v627 = vmax.f32 %v440, 0.0
        %v628 = vmax.f32 %v442, 0.0
        %v629 = vmax.f32 %v553, 0.0
        %v630 = vmax.f32 %v555, 0.0
        %v631 = vmax.f32 %v446, 0.0
        %v632 = vmax.f32 %v448, 0.0
        %v633 = vmax.f32 %v559, 0.0
        %v634 = vmax.f32 %v561, 0.0
        %v635 = vmax.f32 %v450, 0.0
        %v636 = vmax.f32 %v452, 0.0
        %v637 = vmax.f32 %v563, 0.0
        %v638 = vmax.f32 %v565, 0.0
        %v639 = vpack.c.bf16 %v611, %v607
        %v640 = vpack.c.bf16 %v612, %v608
        %v641 = vpack.c.bf16 %v613, %v609
        %v642 = vpack.c.bf16 %v614, %v610
        %v643 = vpack.c.bf16 %v619, %v615
        %v644 = vpack.c.bf16 %v620, %v616
        %v645 = vpack.c.bf16 %v621, %v617
        %v646 = vpack.c.bf16 %v622, %v618
        %v647 = vpack.c.bf16 %v627, %v623
        %v648 = vpack.c.bf16 %v628, %v624
        %v649 = vpack.c.bf16 %v629, %v625
        %v650 = vpack.c.bf16 %v630, %v626
        %v651 = vpack.c.bf16 %v635, %v631
        %v652 = vpack.c.bf16 %v636, %v632
        %v653 = vpack.c.bf16 %v637, %v633
        %v654 = vpack.c.bf16 %v638, %v634
        %656 = vset.pattern.permute.xlu0 0
        %657 = vperm.xlu0 %656, %v325
        %v658 = vpop.permute.xlu0 %657
        %661 = vset.pattern.permute.xlu0 0
        %662 = vperm.xlu0 %661, %v326
        %v663 = vpop.permute.xlu0 %662
        %666 = vset.pattern.permute.xlu0 0
        %667 = vperm.xlu0 %666, %v327
        %v668 = vpop.permute.xlu0 %667
        %671 = vset.pattern.permute.xlu0 0
        %672 = vperm.xlu0 %671, %v328
        %v673 = vpop.permute.xlu0 %672
        %676 = vset.pattern.permute.xlu0 0
        %677 = vperm.xlu0 %676, %v329
        %v678 = vpop.permute.xlu0 %677
        %681 = vset.pattern.permute.xlu0 0
        %682 = vperm.xlu0 %681, %v330
        %v683 = vpop.permute.xlu0 %682
        %686 = vset.pattern.permute.xlu0 0
        %687 = vperm.xlu0 %686, %v331
        %v688 = vpop.permute.xlu0 %687
        %691 = vset.pattern.permute.xlu0 0
        %692 = vperm.xlu0 %691, %v332
        %v693 = vpop.permute.xlu0 %692
        %vm695 = vcmask 523264
        %v697 = vsel %vm695, %v319, 0
        %v700 = vsel %vm695, %v320, 0
        %v703 = vsel %vm695, %v321, 0
        %v706 = vsel %vm695, %v322, 0
        %708 = vmatprep.subr.bf16.mxu0 %v640
        %709 = vmatpush1.bf16.msra.mxu0 %v639
        %710 = vmatprep.subr.bf16.mxu0 %v644
        %711 = vmatpush1.bf16.msra.mxu0 %v643
        %712 = vmatprep.subr.bf16.mxu0 %v648
        %713 = vmatpush1.bf16.msra.mxu0 %v647
        %714 = vmatprep.subr.bf16.mxu0 %v652
        %715 = vmatpush1.bf16.msra.mxu0 %v651
        %716 = vmatprep.subr.bf16.mxu0 0
        %717 = vmatpush1.bf16.msra.mxu0 0
        %718 = vmatprep.subr.bf16.mxu0 0
        %719 = vmatpush1.bf16.msra.mxu0 0
        %720 = vmatprep.subr.bf16.mxu0 0
        %721 = vmatpush1.bf16.msra.mxu0 0
        %722 = vmatprep.subr.bf16.mxu0 0
        %723 = vmatpush1.bf16.msra.mxu0 0
        %724 = vmatprep.subr.bf16.mxu0 0
        %725 = vmatpush1.bf16.msra.mxu0 0
        %726 = vmatprep.subr.bf16.mxu0 0
        %727 = vmatpush1.bf16.msra.mxu0 0
        %728 = vmatprep.subr.bf16.mxu0 0
        %729 = vmatpush1.bf16.msra.mxu0 0
        %730 = vmatprep.subr.bf16.mxu0 0
        %731 = vmatpush1.bf16.msra.mxu0 0
        %732 = vmatprep.subr.bf16.mxu0 0
        %733 = vmatpush1.bf16.msra.mxu0 0
        %734 = vmatprep.subr.bf16.mxu0 0
        %735 = vmatpush1.bf16.msra.mxu0 0
        %736 = vmatprep.subr.bf16.mxu0 0
        %737 = vmatpush1.bf16.msra.mxu0 0
        %738 = vmatprep.subr.bf16.mxu0 0
        %739 = vmatpush1.bf16.msra.mxu0 0
        %740 = vmatprep.mubr.bf16.mxu0 0
        %741 = vmatmul.mubr.bf16.gmra.mrb[0].mxu0 %v697
        %v742 = vpop.f32.mrb[0].mxu0
        %v743 = vadd.f32 %v658, %v742
        %v744 = vpop.f32.mrb[0].mxu0
        %v745 = vadd.f32 %v658, %v744
        %v746 = vpop.f32.mrb[0].mxu0
        %v747 = vadd.f32 %v663, %v746
        %v748 = vpop.f32.mrb[0].mxu0
        %v749 = vadd.f32 %v663, %v748
        %750 = vmatprep.mubr.bf16.mxu0 0
        %751 = vmatmul.mubr.bf16.gmra.mrb[0].mxu0 %v700
        %v752 = vpop.f32.mrb[0].mxu0
        %v753 = vadd.f32 %v668, %v752
        %v754 = vpop.f32.mrb[0].mxu0
        %v755 = vadd.f32 %v668, %v754
        %v756 = vpop.f32.mrb[0].mxu0
        %v757 = vadd.f32 %v673, %v756
        %v758 = vpop.f32.mrb[0].mxu0
        %v759 = vadd.f32 %v673, %v758
        %760 = vmatprep.mubr.bf16.mxu0 0
        %761 = vmatmul.mubr.bf16.gmra.mrb[0].mxu0 %v703
        %v762 = vpop.f32.mrb[0].mxu0
        %v763 = vadd.f32 %v678, %v762
        %v764 = vpop.f32.mrb[0].mxu0
        %v765 = vadd.f32 %v678, %v764
        %v766 = vpop.f32.mrb[0].mxu0
        %v767 = vadd.f32 %v683, %v766
        %v768 = vpop.f32.mrb[0].mxu0
        %v769 = vadd.f32 %v683, %v768
        %770 = vmatprep.mubr.bf16.mxu0 0
        %771 = vmatmul.mubr.bf16.gmra.mrb[0].mxu0 %v706
        %v772 = vpop.f32.mrb[0].mxu0
        %v773 = vadd.f32 %v688, %v772
        %v774 = vpop.f32.mrb[0].mxu0
        %v775 = vadd.f32 %v688, %v774
        %v776 = vpop.f32.mrb[0].mxu0
        %v777 = vadd.f32 %v693, %v776
        %v778 = vpop.f32.mrb[0].mxu0
        %v779 = vadd.f32 %v693, %v778
        %780 = vdwg.mxu0
        %781 = vmatprep.subr.bf16.mxu0 %v642
        %782 = vmatpush1.bf16.msra.mxu0 %v641
        %783 = vmatprep.subr.bf16.mxu0 %v646
        %784 = vmatpush1.bf16.msra.mxu0 %v645
        %785 = vmatprep.subr.bf16.mxu0 %v650
        %786 = vmatpush1.bf16.msra.mxu0 %v649
        %787 = vmatprep.subr.bf16.mxu0 %v654
        %788 = vmatpush1.bf16.msra.mxu0 %v653
        %789 = vmatprep.subr.bf16.mxu0 0
        %790 = vmatpush1.bf16.msra.mxu0 0
        %791 = vmatprep.subr.bf16.mxu0 0
        %792 = vmatpush1.bf16.msra.mxu0 0
        %793 = vmatprep.subr.bf16.mxu0 0
        %794 = vmatpush1.bf16.msra.mxu0 0
        %795 = vmatprep.subr.bf16.mxu0 0
        %796 = vmatpush1.bf16.msra.mxu0 0
        %797 = vmatprep.subr.bf16.mxu0 0
        %798 = vmatpush1.bf16.msra.mxu0 0
        %799 = vmatprep.subr.bf16.mxu0 0
        %800 = vmatpush1.bf16.msra.mxu0 0
        %801 = vmatprep.subr.bf16.mxu0 0
        %802 = vmatpush1.bf16.msra.mxu0 0
        %803 = vmatprep.subr.bf16.mxu0 0
        %804 = vmatpush1.bf16.msra.mxu0 0
        %805 = vmatprep.subr.bf16.mxu0 0
        %806 = vmatpush1.bf16.msra.mxu0 0
        %807 = vmatprep.subr.bf16.mxu0 0
        %808 = vmatpush1.bf16.msra.mxu0 0
        %809 = vmatprep.subr.bf16.mxu0 0
        %810 = vmatpush1.bf16.msra.mxu0 0
        %811 = vmatprep.subr.bf16.mxu0 0
        %812 = vmatpush1.bf16.msra.mxu0 0
        %813 = vmatprep.mubr.bf16.mxu0 0
        %814 = vmatmul.mubr.bf16.gmra.mrb[0].mxu0 %v697
        %v815 = vpop.f32.mrb[0].mxu0
        %v816 = vadd.f32 %v658, %v815
        %v817 = vpop.f32.mrb[0].mxu0
        %v818 = vadd.f32 %v658, %v817
        %v819 = vpop.f32.mrb[0].mxu0
        %v820 = vadd.f32 %v663, %v819
        %v821 = vpop.f32.mrb[0].mxu0
        %v822 = vadd.f32 %v663, %v821
        %823 = vmatprep.mubr.bf16.mxu0 0
        %824 = vmatmul.mubr.bf16.gmra.mrb[0].mxu0 %v700
        %v825 = vpop.f32.mrb[0].mxu0
        %v826 = vadd.f32 %v668, %v825
        %v827 = vpop.f32.mrb[0].mxu0
        %v828 = vadd.f32 %v668, %v827
        %v829 = vpop.f32.mrb[0].mxu0
        %v830 = vadd.f32 %v673, %v829
        %v831 = vpop.f32.mrb[0].mxu0
        %v832 = vadd.f32 %v673, %v831
        %833 = vmatprep.mubr.bf16.mxu0 0
        %834 = vmatmul.mubr.bf16.gmra.mrb[0].mxu0 %v703
        %v835 = vpop.f32.mrb[0].mxu0
        %v836 = vadd.f32 %v678, %v835
        %v837 = vpop.f32.mrb[0].mxu0
        %v838 = vadd.f32 %v678, %v837
        %v839 = vpop.f32.mrb[0].mxu0
        %v840 = vadd.f32 %v683, %v839
        %v841 = vpop.f32.mrb[0].mxu0
        %v842 = vadd.f32 %v683, %v841
        %843 = vmatprep.mubr.bf16.mxu0 0
        %844 = vmatmul.mubr.bf16.gmra.mrb[0].mxu0 %v706
        %v845 = vpop.f32.mrb[0].mxu0
        %v846 = vadd.f32 %v688, %v845
        %v847 = vpop.f32.mrb[0].mxu0
        %v848 = vadd.f32 %v688, %v847
        %v849 = vpop.f32.mrb[0].mxu0
        %v850 = vadd.f32 %v693, %v849
        %v851 = vpop.f32.mrb[0].mxu0
        %v852 = vadd.f32 %v693, %v851
        %853 = vdwg.mxu0
        %v854 = vmax.f32 %v743, 0.0
        %v855 = vmax.f32 %v745, 0.0
        %v856 = vmax.f32 %v816, 0.0
        %v857 = vmax.f32 %v818, 0.0
        %v858 = vmax.f32 %v747, 0.0
        %v859 = vmax.f32 %v749, 0.0
        %v860 = vmax.f32 %v820, 0.0
        %v861 = vmax.f32 %v822, 0.0
        %v862 = vmax.f32 %v753, 0.0
        %v863 = vmax.f32 %v755, 0.0
        %v864 = vmax.f32 %v826, 0.0
        %v865 = vmax.f32 %v828, 0.0
        %v866 = vmax.f32 %v757, 0.0
        %v867 = vmax.f32 %v759, 0.0
        %v868 = vmax.f32 %v830, 0.0
        %v869 = vmax.f32 %v832, 0.0
        %v870 = vmax.f32 %v763, 0.0
        %v871 = vmax.f32 %v765, 0.0
        %v872 = vmax.f32 %v836, 0.0
        %v873 = vmax.f32 %v838, 0.0
        %v874 = vmax.f32 %v767, 0.0
        %v875 = vmax.f32 %v769, 0.0
        %v876 = vmax.f32 %v840, 0.0
        %v877 = vmax.f32 %v842, 0.0
        %v878 = vmax.f32 %v773, 0.0
        %v879 = vmax.f32 %v775, 0.0
        %v880 = vmax.f32 %v846, 0.0
        %v881 = vmax.f32 %v848, 0.0
        %v882 = vmax.f32 %v777, 0.0
        %v883 = vmax.f32 %v779, 0.0
        %v884 = vmax.f32 %v850, 0.0
        %v885 = vmax.f32 %v852, 0.0
        %v886 = vpack.c.bf16 %v858, %v854
        %v887 = vpack.c.bf16 %v859, %v855
        %v888 = vpack.c.bf16 %v860, %v856
        %v889 = vpack.c.bf16 %v861, %v857
        %v890 = vpack.c.bf16 %v866, %v862
        %v891 = vpack.c.bf16 %v867, %v863
        %v892 = vpack.c.bf16 %v868, %v864
        %v893 = vpack.c.bf16 %v869, %v865
        %v894 = vpack.c.bf16 %v874, %v870
        %v895 = vpack.c.bf16 %v875, %v871
        %v896 = vpack.c.bf16 %v876, %v872
        %v897 = vpack.c.bf16 %v877, %v873
        %v898 = vpack.c.bf16 %v882, %v878
        %v899 = vpack.c.bf16 %v883, %v879
        %v900 = vpack.c.bf16 %v884, %v880
        %v901 = vpack.c.bf16 %v885, %v881
        %902 = vset.pattern.permute.xlu0 1
        %903 = vperm.xlu0 %902, %v325
        %v904 = vpop.permute.xlu0 %903
        %v907 = vsel %vm695, %v324, 0
        %909 = vmatprep.subr.bf16.mxu0 %v887
        %910 = vmatpush1.bf16.msra.mxu0 %v886
        %911 = vmatprep.subr.bf16.mxu0 %v891
        %912 = vmatpush1.bf16.msra.mxu0 %v890
        %913 = vmatprep.subr.bf16.mxu0 %v895
        %914 = vmatpush1.bf16.msra.mxu0 %v894
        %915 = vmatprep.subr.bf16.mxu0 %v899
        %916 = vmatpush1.bf16.msra.mxu0 %v898
        %917 = vmatprep.subr.bf16.mxu0 0
        %918 = vmatpush1.bf16.msra.mxu0 0
        %919 = vmatprep.subr.bf16.mxu0 0
        %920 = vmatpush1.bf16.msra.mxu0 0
        %921 = vmatprep.subr.bf16.mxu0 0
        %922 = vmatpush1.bf16.msra.mxu0 0
        %923 = vmatprep.subr.bf16.mxu0 0
        %924 = vmatpush1.bf16.msra.mxu0 0
        %925 = vmatprep.subr.bf16.mxu0 0
        %926 = vmatpush1.bf16.msra.mxu0 0
        %927 = vmatprep.subr.bf16.mxu0 0
        %928 = vmatpush1.bf16.msra.mxu0 0
        %929 = vmatprep.subr.bf16.mxu0 0
        %930 = vmatpush1.bf16.msra.mxu0 0
        %931 = vmatprep.subr.bf16.mxu0 0
        %932 = vmatpush1.bf16.msra.mxu0 0
        %933 = vmatprep.subr.bf16.mxu0 0
        %934 = vmatpush1.bf16.msra.mxu0 0
        %935 = vmatprep.subr.bf16.mxu0 0
        %936 = vmatpush1.bf16.msra.mxu0 0
        %937 = vmatprep.subr.bf16.mxu0 0
        %938 = vmatpush1.bf16.msra.mxu0 0
        %939 = vmatprep.subr.bf16.mxu0 0
        %940 = vmatpush1.bf16.msra.mxu0 0
        %941 = vmatprep.mubr.bf16.mxu0 0
        %942 = vmatmul.mubr.bf16.gmra.mrb[0].mxu0 %v907
        %v943 = vpop.f32.mrb[0].mxu0
        %v944 = vadd.f32 %v904, %v943
        %v945 = vpop.f32.mrb[0].mxu0
        %v946 = vadd.f32 %v904, %v945
        %v947 = vpop.f32.mrb[0].mxu0
        %v948 = vpop.f32.mrb[0].mxu0
        %949 = vdwg.mxu0
        %950 = vmatprep.subr.bf16.mxu0 %v889
        %951 = vmatpush1.bf16.msra.mxu0 %v888
        %952 = vmatprep.subr.bf16.mxu0 %v893
        %953 = vmatpush1.bf16.msra.mxu0 %v892
        %954 = vmatprep.subr.bf16.mxu0 %v897
        %955 = vmatpush1.bf16.msra.mxu0 %v896
        %956 = vmatprep.subr.bf16.mxu0 %v901
        %957 = vmatpush1.bf16.msra.mxu0 %v900
        %958 = vmatprep.subr.bf16.mxu0 0
        %959 = vmatpush1.bf16.msra.mxu0 0
        %960 = vmatprep.subr.bf16.mxu0 0
        %961 = vmatpush1.bf16.msra.mxu0 0
        %962 = vmatprep.subr.bf16.mxu0 0
        %963 = vmatpush1.bf16.msra.mxu0 0
        %964 = vmatprep.subr.bf16.mxu0 0
        %965 = vmatpush1.bf16.msra.mxu0 0
        %966 = vmatprep.subr.bf16.mxu0 0
        %967 = vmatpush1.bf16.msra.mxu0 0
        %968 = vmatprep.subr.bf16.mxu0 0
        %969 = vmatpush1.bf16.msra.mxu0 0
        %970 = vmatprep.subr.bf16.mxu0 0
        %971 = vmatpush1.bf16.msra.mxu0 0
        %972 = vmatprep.subr.bf16.mxu0 0
        %973 = vmatpush1.bf16.msra.mxu0 0
        %974 = vmatprep.subr.bf16.mxu0 0
        %975 = vmatpush1.bf16.msra.mxu0 0
        %976 = vmatprep.subr.bf16.mxu0 0
        %977 = vmatpush1.bf16.msra.mxu0 0
        %978 = vmatprep.subr.bf16.mxu0 0
        %979 = vmatpush1.bf16.msra.mxu0 0
        %980 = vmatprep.subr.bf16.mxu0 0
        %981 = vmatpush1.bf16.msra.mxu0 0
        %982 = vmatprep.mubr.bf16.mxu0 0
        %983 = vmatmul.mubr.bf16.gmra.mrb[0].mxu0 %v907
        %v984 = vpop.f32.mrb[0].mxu0
        %v985 = vadd.f32 %v904, %v984
        %v986 = vpop.f32.mrb[0].mxu0
        %v987 = vadd.f32 %v904, %v986
        %v988 = vpop.f32.mrb[0].mxu0
        %v989 = vpop.f32.mrb[0].mxu0
        %990 = vdwg.mxu0
        %v991 = vlaneseq
        %v992 = vshrl.u32 %v991, 7
        %vm993 = vcmp.lt.s32.totalorder %v992, 6
        %v994 = vxor.u32 %v944, 2147483648
        %v995 = vxor.u32 %v946, 2147483648
        %v996 = vxor.u32 %v985, 2147483648
        %v997 = vxor.u32 %v987, 2147483648
        %v998 = vmul.f32 %v994, 1.442695
        %v999 = vpow.pop %v998
        %v1000 = vmul.f32 %v995, 1.442695
        %v1001 = vpow.pop %v1000
        %v1002 = vmul.f32 %v996, 1.442695
        %v1003 = vpow.pop %v1002
        %v1004 = vmul.f32 %v997, 1.442695
        %v1005 = vpow.pop %v1004
        %v1006 = vadd.f32 %v999, 1.0
        %v1007 = vadd.f32 %v1001, 1.0
        %v1008 = vadd.f32 %v1003, 1.0
        %v1009 = vadd.f32 %v1005, 1.0
        %v1010 = vrcp.pop %v1006
        %v1011 = vmul.f32 1.0, %v1010
        %v1012 = vrcp.pop %v1007
        %v1013 = vmul.f32 1.0, %v1012
        %v1014 = vrcp.pop %v1008
        %v1015 = vmul.f32 1.0, %v1014
        %v1016 = vrcp.pop %v1009
        %v1017 = vmul.f32 1.0, %v1016
        %v1018 = vsub.f32 %v1011, 0.5
        %v1019 = vsub.f32 %v1013, 0.5
        %v1020 = vsub.f32 %v1015, 0.5
        %v1021 = vsub.f32 %v1017, 0.5
        %v1022 = vsel %vm993, %v1018, %v944
        %v1023 = vsel %vm993, %v1019, %v946
        %v1024 = vsel %vm993, %v1020, %v985
        %v1025 = vsel %vm993, %v1021, %v987
        %1026 = vst [vmem:[%s248] sm:$0xff] %v1022
        %1027 = vst [vmem:[%s248 + $0x8] sm:$0xff] %v1023
        %1028 = vst [vmem:[%s248 + $0x10] sm:$0xff] %v1024
        %1029 = vst [vmem:[%s248 + $0x18] sm:$0xff] %v1025
        %v1034 = vrot.slane %v944, 7
        %v1035 = vrot.slane %v946, 7
        %v1036 = vrot.slane %v985, 7
        %v1037 = vrot.slane %v987, 7
        %vm1042 = vcmp.gt.f32.partialorder %v944, %v1034
        %vm1043 = vcmp.gt.f32.partialorder %v946, %v1035
        %vm1044 = vcmp.gt.f32.partialorder %v985, %v1036
        %vm1045 = vcmp.gt.f32.partialorder %v987, %v1037
        %v1046 = vpack.c.bf16 %v1022, %v1022
        %v1047 = vpack.c.bf16 %v1023, %v1023
        %v1048 = vpack.c.bf16 %v1024, %v1024
        %v1049 = vpack.c.bf16 %v1025, %v1025
        %vm1050 = vcmask 64512
        %v1052 = vsel %vm1050, %v303, 0
        %v1055 = vsel %vm1050, %v304, 0
        %v1058 = vsel %vm1050, %v305, 0
        %v1061 = vsel %vm1050, %v306, 0
        %v1064 = vsel %vm1050, %v307, 0
        %v1067 = vsel %vm1050, %v308, 0
        %v1070 = vsel %vm1050, %v309, 0
        %v1073 = vsel %vm1050, %v310, 0
        %vm1075 = vcmask 1043456
        %v1077 = vsel %vm1075, %v1046, 0
        %v1080 = vsel %vm1075, %v1047, 0
        %v1083 = vsel %vm1075, %v1048, 0
        %v1086 = vsel %vm1075, %v1049, 0
        %1088 = vmatprep.subr.bf16.mxu0 %v1080
        %1089 = vmatpush1.bf16.msra.mxu0 %v1077
        %1090 = vmatprep.subr.bf16.mxu0 0
        %1091 = vmatpush1.bf16.msra.mxu0 0
        %1092 = vmatprep.subr.bf16.mxu0 0
        %1093 = vmatpush1.bf16.msra.mxu0 0
        %1094 = vmatprep.subr.bf16.mxu0 0
        %1095 = vmatpush1.bf16.msra.mxu0 0
        %1096 = vmatprep.subr.bf16.mxu0 0
        %1097 = vmatpush1.bf16.msra.mxu0 0
        %1098 = vmatprep.subr.bf16.mxu0 0
        %1099 = vmatpush1.bf16.msra.mxu0 0
        %1100 = vmatprep.subr.bf16.mxu0 0
        %1101 = vmatpush1.bf16.msra.mxu0 0
        %1102 = vmatprep.subr.bf16.mxu0 0
        %1103 = vmatpush1.bf16.msra.mxu0 0
        %1104 = vmatprep.subr.bf16.mxu0 0
        %1105 = vmatpush1.bf16.msra.mxu0 0
        %1106 = vmatprep.subr.bf16.mxu0 0
        %1107 = vmatpush1.bf16.msra.mxu0 0
        %1108 = vmatprep.subr.bf16.mxu0 0
        %1109 = vmatpush1.bf16.msra.mxu0 0
        %1110 = vmatprep.subr.bf16.mxu0 0
        %1111 = vmatpush1.bf16.msra.mxu0 0
        %1112 = vmatprep.subr.bf16.mxu0 0
        %1113 = vmatpush1.bf16.msra.mxu0 0
        %1114 = vmatprep.subr.bf16.mxu0 0
        %1115 = vmatpush1.bf16.msra.mxu0 0
        %1116 = vmatprep.subr.bf16.mxu0 0
        %1117 = vmatpush1.bf16.msra.mxu0 0
        %1118 = vmatprep.subr.bf16.mxu0 0
        %1119 = vmatpush1.bf16.msra.mxu0 0
        %1120 = vmatprep.mubr.bf16.mxu0 0
        %1121 = vmatmul.mubr.bf16.gmra.mrb[0].mxu0 %v1052
        %v1122 = vpop.f32.mrb[0].mxu0
        %v1123 = vadd.f32 0.0, %v1122
        %v1124 = vpop.f32.mrb[0].mxu0
        %v1125 = vadd.f32 0.0, %v1124
        %v1126 = vpop.f32.mrb[0].mxu0
        %v1127 = vadd.f32 0.0, %v1126
        %v1128 = vpop.f32.mrb[0].mxu0
        %v1129 = vadd.f32 0.0, %v1128
        %1130 = vmatprep.mubr.bf16.mxu0 0
        %1131 = vmatmul.mubr.bf16.gmra.mrb[0].mxu0 %v1055
        %v1132 = vpop.f32.mrb[0].mxu0
        %v1133 = vadd.f32 0.0, %v1132
        %v1134 = vpop.f32.mrb[0].mxu0
        %v1135 = vadd.f32 0.0, %v1134
        %v1136 = vpop.f32.mrb[0].mxu0
        %v1137 = vadd.f32 0.0, %v1136
        %v1138 = vpop.f32.mrb[0].mxu0
        %v1139 = vadd.f32 0.0, %v1138
        %1140 = vmatprep.mubr.bf16.mxu0 0
        %1141 = vmatmul.mubr.bf16.gmra.mrb[0].mxu0 %v1058
        %v1142 = vpop.f32.mrb[0].mxu0
        %v1143 = vadd.f32 0.0, %v1142
        %v1144 = vpop.f32.mrb[0].mxu0
        %v1145 = vadd.f32 0.0, %v1144
        %v1146 = vpop.f32.mrb[0].mxu0
        %v1147 = vadd.f32 0.0, %v1146
        %v1148 = vpop.f32.mrb[0].mxu0
        %v1149 = vadd.f32 0.0, %v1148
        %1150 = vmatprep.mubr.bf16.mxu0 0
        %1151 = vmatmul.mubr.bf16.gmra.mrb[0].mxu0 %v1061
        %v1152 = vpop.f32.mrb[0].mxu0
        %v1153 = vadd.f32 0.0, %v1152
        %v1154 = vpop.f32.mrb[0].mxu0
        %v1155 = vadd.f32 0.0, %v1154
        %v1156 = vpop.f32.mrb[0].mxu0
        %v1157 = vadd.f32 0.0, %v1156
        %v1158 = vpop.f32.mrb[0].mxu0
        %v1159 = vadd.f32 0.0, %v1158
        %1160 = vmatprep.mubr.bf16.mxu0 0
        %1161 = vmatmul.mubr.bf16.gmra.mrb[0].mxu0 %v1064
        %v1162 = vpop.f32.mrb[0].mxu0
        %v1163 = vadd.f32 0.0, %v1162
        %v1164 = vpop.f32.mrb[0].mxu0
        %v1165 = vadd.f32 0.0, %v1164
        %v1166 = vpop.f32.mrb[0].mxu0
        %v1167 = vadd.f32 0.0, %v1166
        %v1168 = vpop.f32.mrb[0].mxu0
        %v1169 = vadd.f32 0.0, %v1168
        %1170 = vmatprep.mubr.bf16.mxu0 0
        %1171 = vmatmul.mubr.bf16.gmra.mrb[0].mxu0 %v1067
        %v1172 = vpop.f32.mrb[0].mxu0
        %v1173 = vadd.f32 0.0, %v1172
        %v1174 = vpop.f32.mrb[0].mxu0
        %v1175 = vadd.f32 0.0, %v1174
        %v1176 = vpop.f32.mrb[0].mxu0
        %v1177 = vadd.f32 0.0, %v1176
        %v1178 = vpop.f32.mrb[0].mxu0
        %v1179 = vadd.f32 0.0, %v1178
        %1180 = vmatprep.mubr.bf16.mxu0 0
        %1181 = vmatmul.mubr.bf16.gmra.mrb[0].mxu0 %v1070
        %v1182 = vpop.f32.mrb[0].mxu0
        %v1183 = vadd.f32 0.0, %v1182
        %v1184 = vpop.f32.mrb[0].mxu0
        %v1185 = vadd.f32 0.0, %v1184
        %v1186 = vpop.f32.mrb[0].mxu0
        %v1187 = vadd.f32 0.0, %v1186
        %v1188 = vpop.f32.mrb[0].mxu0
        %v1189 = vadd.f32 0.0, %v1188
        %1190 = vmatprep.mubr.bf16.mxu0 0
        %1191 = vmatmul.mubr.bf16.gmra.mrb[0].mxu0 %v1073
        %v1192 = vpop.f32.mrb[0].mxu0
        %v1193 = vadd.f32 0.0, %v1192
        %v1194 = vpop.f32.mrb[0].mxu0
        %v1195 = vadd.f32 0.0, %v1194
        %v1196 = vpop.f32.mrb[0].mxu0
        %v1197 = vadd.f32 0.0, %v1196
        %v1198 = vpop.f32.mrb[0].mxu0
        %v1199 = vadd.f32 0.0, %v1198
        %1200 = vdwg.mxu0
        %1201 = vmatprep.subr.bf16.mxu0 %v1086
        %1202 = vmatpush1.bf16.msra.mxu0 %v1083
        %1203 = vmatprep.subr.bf16.mxu0 0
        %1204 = vmatpush1.bf16.msra.mxu0 0
        %1205 = vmatprep.subr.bf16.mxu0 0
        %1206 = vmatpush1.bf16.msra.mxu0 0
        %1207 = vmatprep.subr.bf16.mxu0 0
        %1208 = vmatpush1.bf16.msra.mxu0 0
        %1209 = vmatprep.subr.bf16.mxu0 0
        %1210 = vmatpush1.bf16.msra.mxu0 0
        %1211 = vmatprep.subr.bf16.mxu0 0
        %1212 = vmatpush1.bf16.msra.mxu0 0
        %1213 = vmatprep.subr.bf16.mxu0 0
        %1214 = vmatpush1.bf16.msra.mxu0 0
        %1215 = vmatprep.subr.bf16.mxu0 0
        %1216 = vmatpush1.bf16.msra.mxu0 0
        %1217 = vmatprep.subr.bf16.mxu0 0
        %1218 = vmatpush1.bf16.msra.mxu0 0
        %1219 = vmatprep.subr.bf16.mxu0 0
        %1220 = vmatpush1.bf16.msra.mxu0 0
        %1221 = vmatprep.subr.bf16.mxu0 0
        %1222 = vmatpush1.bf16.msra.mxu0 0
        %1223 = vmatprep.subr.bf16.mxu0 0
        %1224 = vmatpush1.bf16.msra.mxu0 0
        %1225 = vmatprep.subr.bf16.mxu0 0
        %1226 = vmatpush1.bf16.msra.mxu0 0
        %1227 = vmatprep.subr.bf16.mxu0 0
        %1228 = vmatpush1.bf16.msra.mxu0 0
        %1229 = vmatprep.subr.bf16.mxu0 0
        %1230 = vmatpush1.bf16.msra.mxu0 0
        %1231 = vmatprep.subr.bf16.mxu0 0
        %1232 = vmatpush1.bf16.msra.mxu0 0
        %1233 = vmatprep.mubr.bf16.mxu0 0
        %1234 = vmatmul.mubr.bf16.gmra.mrb[0].mxu0 %v1052
        %v1235 = vpop.f32.mrb[0].mxu0
        %v1236 = vadd.f32 0.0, %v1235
        %v1237 = vpop.f32.mrb[0].mxu0
        %v1238 = vadd.f32 0.0, %v1237
        %v1239 = vpop.f32.mrb[0].mxu0
        %v1240 = vadd.f32 0.0, %v1239
        %v1241 = vpop.f32.mrb[0].mxu0
        %v1242 = vadd.f32 0.0, %v1241
        %1243 = vmatprep.mubr.bf16.mxu0 0
        %1244 = vmatmul.mubr.bf16.gmra.mrb[0].mxu0 %v1055
        %v1245 = vpop.f32.mrb[0].mxu0
        %v1246 = vadd.f32 0.0, %v1245
        %v1247 = vpop.f32.mrb[0].mxu0
        %v1248 = vadd.f32 0.0, %v1247
        %v1249 = vpop.f32.mrb[0].mxu0
        %v1250 = vadd.f32 0.0, %v1249
        %v1251 = vpop.f32.mrb[0].mxu0
        %v1252 = vadd.f32 0.0, %v1251
        %1253 = vmatprep.mubr.bf16.mxu0 0
        %1254 = vmatmul.mubr.bf16.gmra.mrb[0].mxu0 %v1058
        %v1255 = vpop.f32.mrb[0].mxu0
        %v1256 = vadd.f32 0.0, %v1255
        %v1257 = vpop.f32.mrb[0].mxu0
        %v1258 = vadd.f32 0.0, %v1257
        %v1259 = vpop.f32.mrb[0].mxu0
        %v1260 = vadd.f32 0.0, %v1259
        %v1261 = vpop.f32.mrb[0].mxu0
        %v1262 = vadd.f32 0.0, %v1261
        %1263 = vmatprep.mubr.bf16.mxu0 0
        %1264 = vmatmul.mubr.bf16.gmra.mrb[0].mxu0 %v1061
        %v1265 = vpop.f32.mrb[0].mxu0
        %v1266 = vadd.f32 0.0, %v1265
        %v1267 = vpop.f32.mrb[0].mxu0
        %v1268 = vadd.f32 0.0, %v1267
        %v1269 = vpop.f32.mrb[0].mxu0
        %v1270 = vadd.f32 0.0, %v1269
        %v1271 = vpop.f32.mrb[0].mxu0
        %v1272 = vadd.f32 0.0, %v1271
        %1273 = vmatprep.mubr.bf16.mxu0 0
        %1274 = vmatmul.mubr.bf16.gmra.mrb[0].mxu0 %v1064
        %v1275 = vpop.f32.mrb[0].mxu0
        %v1276 = vadd.f32 0.0, %v1275
        %v1277 = vpop.f32.mrb[0].mxu0
        %v1278 = vadd.f32 0.0, %v1277
        %v1279 = vpop.f32.mrb[0].mxu0
        %v1280 = vadd.f32 0.0, %v1279
        %v1281 = vpop.f32.mrb[0].mxu0
        %v1282 = vadd.f32 0.0, %v1281
        %1283 = vmatprep.mubr.bf16.mxu0 0
        %1284 = vmatmul.mubr.bf16.gmra.mrb[0].mxu0 %v1067
        %v1285 = vpop.f32.mrb[0].mxu0
        %v1286 = vadd.f32 0.0, %v1285
        %v1287 = vpop.f32.mrb[0].mxu0
        %v1288 = vadd.f32 0.0, %v1287
        %v1289 = vpop.f32.mrb[0].mxu0
        %v1290 = vadd.f32 0.0, %v1289
        %v1291 = vpop.f32.mrb[0].mxu0
        %v1292 = vadd.f32 0.0, %v1291
        %1293 = vmatprep.mubr.bf16.mxu0 0
        %1294 = vmatmul.mubr.bf16.gmra.mrb[0].mxu0 %v1070
        %v1295 = vpop.f32.mrb[0].mxu0
        %v1296 = vadd.f32 0.0, %v1295
        %v1297 = vpop.f32.mrb[0].mxu0
        %v1298 = vadd.f32 0.0, %v1297
        %v1299 = vpop.f32.mrb[0].mxu0
        %v1300 = vadd.f32 0.0, %v1299
        %v1301 = vpop.f32.mrb[0].mxu0
        %v1302 = vadd.f32 0.0, %v1301
        %1303 = vmatprep.mubr.bf16.mxu0 0
        %1304 = vmatmul.mubr.bf16.gmra.mrb[0].mxu0 %v1073
        %v1305 = vpop.f32.mrb[0].mxu0
        %v1306 = vadd.f32 0.0, %v1305
        %v1307 = vpop.f32.mrb[0].mxu0
        %v1308 = vadd.f32 0.0, %v1307
        %v1309 = vpop.f32.mrb[0].mxu0
        %v1310 = vadd.f32 0.0, %v1309
        %v1311 = vpop.f32.mrb[0].mxu0
        %v1312 = vadd.f32 0.0, %v1311
        %1313 = vdwg.mxu0
        %v1314 = vsel %vm1042, 1, 0
        %v1315 = vsel %vm1043, 1, 0
        %v1316 = vsel %vm1044, 1, 0
        %v1317 = vsel %vm1045, 1, 0
        %v1318 = vlaneseq
        %v1319 = vshrl.u32 %v1318, 7
        %v1320 = vsub.s32 7, %v1319
        %v1321 = vrot.slane %v1314, %v1320
        %v1322 = vlaneseq
        %v1323 = vshrl.u32 %v1322, 7
        %v1324 = vsub.s32 7, %v1323
        %v1325 = vrot.slane %v1315, %v1324
        %v1326 = vlaneseq
        %v1327 = vshrl.u32 %v1326, 7
        %v1328 = vsub.s32 7, %v1327
        %v1329 = vrot.slane %v1316, %v1328
        %v1330 = vlaneseq
        %v1331 = vshrl.u32 %v1330, 7
        %v1332 = vsub.s32 7, %v1331
        %v1333 = vrot.slane %v1317, %v1332
        %vm1334 = vcmp.eq.s32.totalorder %v1321, 1
        %vm1335 = vcmp.eq.s32.totalorder %v1325, 1
        %vm1336 = vcmp.eq.s32.totalorder %v1329, 1
        %vm1337 = vcmp.eq.s32.totalorder %v1333, 1
        %v1338 = vsel %vm1334, %v1163, %v1123
        %v1339 = vsel %vm1335, %v1165, %v1125
        %v1340 = vsel %vm1336, %v1276, %v1236
        %v1341 = vsel %vm1337, %v1278, %v1238
        %v1342 = vsel %vm1334, %v1167, %v1127
        %v1343 = vsel %vm1335, %v1169, %v1129
        %v1344 = vsel %vm1336, %v1280, %v1240
        %v1345 = vsel %vm1337, %v1282, %v1242
        %v1346 = vsel %vm1334, %v1173, %v1133
        %v1347 = vsel %vm1335, %v1175, %v1135
        %v1348 = vsel %vm1336, %v1286, %v1246
        %v1349 = vsel %vm1337, %v1288, %v1248
        %v1350 = vsel %vm1334, %v1177, %v1137
        %v1351 = vsel %vm1335, %v1179, %v1139
        %v1352 = vsel %vm1336, %v1290, %v1250
        %v1353 = vsel %vm1337, %v1292, %v1252
        %v1354 = vsel %vm1334, %v1183, %v1143
        %v1355 = vsel %vm1335, %v1185, %v1145
        %v1356 = vsel %vm1336, %v1296, %v1256
        %v1357 = vsel %vm1337, %v1298, %v1258
        %v1358 = vsel %vm1334, %v1187, %v1147
        %v1359 = vsel %vm1335, %v1189, %v1149
        %v1360 = vsel %vm1336, %v1300, %v1260
        %v1361 = vsel %vm1337, %v1302, %v1262
        %v1362 = vsel %vm1334, %v1193, %v1153
        %v1363 = vsel %vm1335, %v1195, %v1155
        %v1364 = vsel %vm1336, %v1306, %v1266
        %v1365 = vsel %vm1337, %v1308, %v1268
        %v1366 = vsel %vm1334, %v1197, %v1157
        %v1367 = vsel %vm1335, %v1199, %v1159
        %v1368 = vsel %vm1336, %v1310, %v1270
        %v1369 = vsel %vm1337, %v1312, %v1272
        %v1370 = vadd.f32 %v456, %v1338
        %v1371 = vadd.f32 %v458, %v1339
        %v1372 = vadd.f32 %v569, %v1340
        %v1373 = vadd.f32 %v571, %v1341
        %v1374 = vadd.f32 %v460, %v1342
        %v1375 = vadd.f32 %v462, %v1343
        %v1376 = vadd.f32 %v573, %v1344
        %v1377 = vadd.f32 %v575, %v1345
        %v1378 = vadd.f32 %v466, %v1346
        %v1379 = vadd.f32 %v468, %v1347
        %v1380 = vadd.f32 %v579, %v1348
        %v1381 = vadd.f32 %v581, %v1349
        %v1382 = vadd.f32 %v470, %v1350
        %v1383 = vadd.f32 %v472, %v1351
        %v1384 = vadd.f32 %v583, %v1352
        %v1385 = vadd.f32 %v585, %v1353
        %v1386 = vadd.f32 %v476, %v1354
        %v1387 = vadd.f32 %v478, %v1355
        %v1388 = vadd.f32 %v589, %v1356
        %v1389 = vadd.f32 %v591, %v1357
        %v1390 = vadd.f32 %v480, %v1358
        %v1391 = vadd.f32 %v482, %v1359
        %v1392 = vadd.f32 %v593, %v1360
        %v1393 = vadd.f32 %v595, %v1361
        %v1394 = vadd.f32 %v486, %v1362
        %v1395 = vadd.f32 %v488, %v1363
        %v1396 = vadd.f32 %v599, %v1364
        %v1397 = vadd.f32 %v601, %v1365
        %v1398 = vadd.f32 %v490, %v1366
        %v1399 = vadd.f32 %v492, %v1367
        %v1400 = vadd.f32 %v603, %v1368
        %v1401 = vadd.f32 %v605, %v1369
        %v1402 = vmax.f32 %v1370, 0.0
        %v1403 = vmax.f32 %v1371, 0.0
        %v1404 = vmax.f32 %v1372, 0.0
        %v1405 = vmax.f32 %v1373, 0.0
        %v1406 = vmax.f32 %v1374, 0.0
        %v1407 = vmax.f32 %v1375, 0.0
        %v1408 = vmax.f32 %v1376, 0.0
        %v1409 = vmax.f32 %v1377, 0.0
        %v1410 = vmax.f32 %v1378, 0.0
        %v1411 = vmax.f32 %v1379, 0.0
        %v1412 = vmax.f32 %v1380, 0.0
        %v1413 = vmax.f32 %v1381, 0.0
        %v1414 = vmax.f32 %v1382, 0.0
        %v1415 = vmax.f32 %v1383, 0.0
        %v1416 = vmax.f32 %v1384, 0.0
        %v1417 = vmax.f32 %v1385, 0.0
        %v1418 = vmax.f32 %v1386, 0.0
        %v1419 = vmax.f32 %v1387, 0.0
        %v1420 = vmax.f32 %v1388, 0.0
        %v1421 = vmax.f32 %v1389, 0.0
        %v1422 = vmax.f32 %v1390, 0.0
        %v1423 = vmax.f32 %v1391, 0.0
        %v1424 = vmax.f32 %v1392, 0.0
        %v1425 = vmax.f32 %v1393, 0.0
        %v1426 = vmax.f32 %v1394, 0.0
        %v1427 = vmax.f32 %v1395, 0.0
        %v1428 = vmax.f32 %v1396, 0.0
        %v1429 = vmax.f32 %v1397, 0.0
        %v1430 = vmax.f32 %v1398, 0.0
        %v1431 = vmax.f32 %v1399, 0.0
        %v1432 = vmax.f32 %v1400, 0.0
        %v1433 = vmax.f32 %v1401, 0.0
        %v1434 = vmax.f32 %v1402, %v1403
        %1435 = vmax.xlane.f32.xlu0 %v1434
        %v1436 = vpop.xlane.xlu0 %1435
        %v1437 = vmax.f32 %v1406, %v1407
        %1438 = vmax.xlane.f32.xlu0 %v1437
        %v1439 = vpop.xlane.xlu0 %1438
        %v1440 = vmax.f32 %v1410, %v1411
        %1441 = vmax.xlane.f32.xlu0 %v1440
        %v1442 = vpop.xlane.xlu0 %1441
        %v1443 = vmax.f32 %v1414, %v1415
        %1444 = vmax.xlane.f32.xlu0 %v1443
        %v1445 = vpop.xlane.xlu0 %1444
        %v1446 = vmax.f32 %v1418, %v1419
        %1447 = vmax.xlane.f32.xlu0 %v1446
        %v1448 = vpop.xlane.xlu0 %1447
        %v1449 = vmax.f32 %v1422, %v1423
        %1450 = vmax.xlane.f32.xlu0 %v1449
        %v1451 = vpop.xlane.xlu0 %1450
        %v1452 = vmax.f32 %v1426, %v1427
        %1453 = vmax.xlane.f32.xlu0 %v1452
        %v1454 = vpop.xlane.xlu0 %1453
        %v1455 = vmax.f32 %v1430, %v1431
        %1456 = vmax.xlane.f32.xlu0 %v1455
        %v1457 = vpop.xlane.xlu0 %1456
        %v1458 = vmax.f32 %v1404, %v1405
        %1459 = vmax.xlane.f32.xlu0 %v1458
        %v1460 = vpop.xlane.xlu0 %1459
        %v1461 = vmax.f32 %v1408, %v1409
        %1462 = vmax.xlane.f32.xlu0 %v1461
        %v1463 = vpop.xlane.xlu0 %1462
        %v1464 = vmax.f32 %v1412, %v1413
        %1465 = vmax.xlane.f32.xlu0 %v1464
        %v1466 = vpop.xlane.xlu0 %1465
        %v1467 = vmax.f32 %v1416, %v1417
        %1468 = vmax.xlane.f32.xlu0 %v1467
        %v1469 = vpop.xlane.xlu0 %1468
        %v1470 = vmax.f32 %v1420, %v1421
        %1471 = vmax.xlane.f32.xlu0 %v1470
        %v1472 = vpop.xlane.xlu0 %1471
        %v1473 = vmax.f32 %v1424, %v1425
        %1474 = vmax.xlane.f32.xlu0 %v1473
        %v1475 = vpop.xlane.xlu0 %1474
        %v1476 = vmax.f32 %v1428, %v1429
        %1477 = vmax.xlane.f32.xlu0 %v1476
        %v1478 = vpop.xlane.xlu0 %1477
        %v1479 = vmax.f32 %v1432, %v1433
        %1480 = vmax.xlane.f32.xlu0 %v1479
        %v1481 = vpop.xlane.xlu0 %1480
        %v1490 = vlaneseq
        %v1491 = vand.u32 %v1490, 127
        %v1492 = vlaneseq
        %v1493 = vshrl.u32 %v1492, 7
        %v1494 = vsub.s32 %v1491, %v1493
        %v1495 = vrot.slane %v1436, %v1494
        %v1496 = vadd.s32 %v1491, 4294967288
        %v1497 = vlaneseq
        %v1498 = vshrl.u32 %v1497, 7
        %v1499 = vsub.s32 %v1496, %v1498
        %v1500 = vrot.slane %v1439, %v1499
        %vm1501 = vcmask 130112
        %v1502 = vsel %vm1501, %v1500, %v1495
        %v1503 = vadd.s32 %v1491, 4294967280
        %v1504 = vlaneseq
        %v1505 = vshrl.u32 %v1504, 7
        %v1506 = vsub.s32 %v1503, %v1505
        %v1507 = vrot.slane %v1442, %v1506
        %vm1508 = vcmask 195712
        %v1509 = vsel %vm1508, %v1507, %v1502
        %v1510 = vadd.s32 %v1491, 4294967272
        %v1511 = vlaneseq
        %v1512 = vshrl.u32 %v1511, 7
        %v1513 = vsub.s32 %v1510, %v1512
        %v1514 = vrot.slane %v1445, %v1513
        %vm1515 = vcmask 261312
        %v1516 = vsel %vm1515, %v1514, %v1509
        %v1517 = vadd.s32 %v1491, 4294967264
        %v1518 = vlaneseq
        %v1519 = vshrl.u32 %v1518, 7
        %v1520 = vsub.s32 %v1517, %v1519
        %v1521 = vrot.slane %v1448, %v1520
        %vm1522 = vcmask 326912
        %v1523 = vsel %vm1522, %v1521, %v1516
        %v1524 = vadd.s32 %v1491, 4294967256
        %v1525 = vlaneseq
        %v1526 = vshrl.u32 %v1525, 7
        %v1527 = vsub.s32 %v1524, %v1526
        %v1528 = vrot.slane %v1451, %v1527
        %vm1529 = vcmask 392512
        %v1530 = vsel %vm1529, %v1528, %v1523
        %v1531 = vadd.s32 %v1491, 4294967248
        %v1532 = vlaneseq
        %v1533 = vshrl.u32 %v1532, 7
        %v1534 = vsub.s32 %v1531, %v1533
        %v1535 = vrot.slane %v1454, %v1534
        %vm1536 = vcmask 458112
        %v1537 = vsel %vm1536, %v1535, %v1530
        %v1538 = vadd.s32 %v1491, 4294967240
        %v1539 = vlaneseq
        %v1540 = vshrl.u32 %v1539, 7
        %v1541 = vsub.s32 %v1538, %v1540
        %v1542 = vrot.slane %v1457, %v1541
        %vm1543 = vcmask 523712
        %v1544 = vsel %vm1543, %v1542, %v1537
        %v1554 = vadd.s32 %v1491, 4294967232
        %v1555 = vlaneseq
        %v1556 = vshrl.u32 %v1555, 7
        %v1557 = vsub.s32 %v1554, %v1556
        %v1558 = vrot.slane %v1460, %v1557
        %v1559 = vadd.s32 %v1491, 4294967224
        %v1560 = vlaneseq
        %v1561 = vshrl.u32 %v1560, 7
        %v1562 = vsub.s32 %v1559, %v1561
        %v1563 = vrot.slane %v1463, %v1562
        %vm1564 = vcmask 654912
        %v1565 = vsel %vm1564, %v1563, %v1558
        %v1566 = vadd.s32 %v1491, 4294967216
        %v1567 = vlaneseq
        %v1568 = vshrl.u32 %v1567, 7
        %v1569 = vsub.s32 %v1566, %v1568
        %v1570 = vrot.slane %v1466, %v1569
        %vm1571 = vcmask 720512
        %v1572 = vsel %vm1571, %v1570, %v1565
        %v1573 = vadd.s32 %v1491, 4294967208
        %v1574 = vlaneseq
        %v1575 = vshrl.u32 %v1574, 7
        %v1576 = vsub.s32 %v1573, %v1575
        %v1577 = vrot.slane %v1469, %v1576
        %vm1578 = vcmask 786112
        %v1579 = vsel %vm1578, %v1577, %v1572
        %v1580 = vadd.s32 %v1491, 4294967200
        %v1581 = vlaneseq
        %v1582 = vshrl.u32 %v1581, 7
        %v1583 = vsub.s32 %v1580, %v1582
        %v1584 = vrot.slane %v1472, %v1583
        %vm1585 = vcmask 851712
        %v1586 = vsel %vm1585, %v1584, %v1579
        %v1587 = vadd.s32 %v1491, 4294967192
        %v1588 = vlaneseq
        %v1589 = vshrl.u32 %v1588, 7
        %v1590 = vsub.s32 %v1587, %v1589
        %v1591 = vrot.slane %v1475, %v1590
        %vm1592 = vcmask 917312
        %v1593 = vsel %vm1592, %v1591, %v1586
        %v1594 = vadd.s32 %v1491, 4294967184
        %v1595 = vlaneseq
        %v1596 = vshrl.u32 %v1595, 7
        %v1597 = vsub.s32 %v1594, %v1596
        %v1598 = vrot.slane %v1478, %v1597
        %vm1599 = vcmask 982912
        %v1600 = vsel %vm1599, %v1598, %v1593
        %v1601 = vadd.s32 %v1491, 4294967176
        %v1602 = vlaneseq
        %v1603 = vshrl.u32 %v1602, 7
        %v1604 = vsub.s32 %v1601, %v1603
        %v1605 = vrot.slane %v1481, %v1604
        %vm1606 = vcmask 1048512
        %v1607 = vsel %vm1606, %v1605, %v1600
        %v1609 = vsel %vm695, %v1544, %v1607
        %1610 = vst [vmem:[%s254] sm:$0x1] %v1609
        %s1611 = sand.u32 %s142, 1
        %s1612 = scalar_lea.sflag [#allocation3], %s1611
        %s1613 = sand.u32 %s142, 1
        %s1614 = smul.addr %s1613, 32
        %s1615 = scalar_lea.vmem [#allocation2], %s1614
        %s1616 = sand.u32 %s168, 1
        %s1617 = scalar_lea.sflag [#allocation5], %s1616
        %s1618 = sand.u32 %s168, 1
        %s1619 = scalar_lea.vmem [#allocation4], %s1618
        // Predicated region
        $region41: #{tpu_custom_call.1} parent=39 // pred_check
          %p1620 = pneg %p152
        $region42: #{tpu_custom_call.1} parent=39 // pred_check_branch
          %1622 = sbr.rel (%p1620) target = $region44
        $region43: #{tpu_custom_call.1} parent=39 // pred_region
          %s1624 = ssub.s32 512, 512
          %1625 = vsyncadd %s1612, %s1624
          %s1626 = smul.addr %s24, 4
          %s1627 = smul.addr %s1626, 128
          %s1628 = scalar_lea.hbm %s5, %s1627
          %s1630 = sshll.u32 %s1615, 4
          %s1631 = int_to_ptr.vmem [resolvable:$true] %s1630
          %1633 = dma.vmem_to_hbm [thread:$0]  %s1631, 512, %s1628, %s1612
        $region44: #{tpu_custom_call.1} parent=39 // pred_fallthru
          _
        // Predicated region
        $region45: #{tpu_custom_call.1} parent=39 // pred_check
          %p1634 = pneg %p178
        $region46: #{tpu_custom_call.1} parent=39 // pred_check_branch
          %1636 = sbr.rel (%p1634) target = $region48
        $region47: #{tpu_custom_call.1} parent=39 // pred_region
          %s1638 = ssub.s32 16, 16
          %1639 = vsyncadd %s1617, %s1638
          %s1640 = smul.addr %s24, 16
          %s1641 = scalar_lea.hbm %s6, %s1640
          %s1643 = sshll.u32 %s1619, 4
          %s1644 = int_to_ptr.vmem [resolvable:$true] %s1643
          %1646 = dma.vmem_to_hbm [thread:$0]  %s1644, 16, %s1641, %s1617
        $region48: #{tpu_custom_call.1} parent=39 // pred_fallthru
          _
      $region40: #{tpu_custom_call.1} parent=5 // pred_fallthru
        _
      %p1647 = scmp.le.s32.totalorder 2, %s19
      // Predicated region
      $region49: #{tpu_custom_call.1} parent=5 // pred_check
        %p1648 = pneg %p1647
      $region50: #{tpu_custom_call.1} parent=5 // pred_check_branch
        %1650 = sbr.rel (%p1648) target = $region52
      $region51: #{tpu_custom_call.1} parent=5 // pred_region
        %s1651 = ssub.s32 %s19, 2
        // Predicated region
        $region53: #{tpu_custom_call.1} parent=51 // pred_check
          %p1652 = pneg %p158
        $region54: #{tpu_custom_call.1} parent=51 // pred_check_branch
          %1654 = sbr.rel (%p1652) target = $region56
        $region55: #{tpu_custom_call.1} parent=51 // pred_region
          %s1655 = sand.u32 %s143, 1
          %s1656 = scalar_lea.sflag [#allocation3], %s1655
          %s1657 = sand.u32 %s143, 1
          %s1658 = smul.addr %s1657, 32
          %s1659 = scalar_lea.vmem [#allocation2], %s1658
          %1660 = dma.done %s1656, 512
        $region56: #{tpu_custom_call.1} parent=51 // pred_fallthru
          _
        // Predicated region
        $region57: #{tpu_custom_call.1} parent=51 // pred_check
          %p1661 = pneg %p184
        $region58: #{tpu_custom_call.1} parent=51 // pred_check_branch
          %1663 = sbr.rel (%p1661) target = $region60
        $region59: #{tpu_custom_call.1} parent=51 // pred_region
          %s1664 = sand.u32 %s169, 1
          %s1665 = scalar_lea.sflag [#allocation5], %s1664
          %s1666 = sand.u32 %s169, 1
          %s1667 = scalar_lea.vmem [#allocation4], %s1666
          %1668 = dma.done %s1665, 16
        $region60: #{tpu_custom_call.1} parent=51 // pred_fallthru
          _
      $region52: #{tpu_custom_call.1} parent=5 // pred_fallthru
        _
    $region6: #{tpu_custom_call.1} parent=1 // loop_footer
      %s23 = sadd.s32 1, %s19
    $region7: #{tpu_custom_call.1} parent=1 // loop_footer_branch
      %18 = sbr.rel target = $region3
    $region8: #{tpu_custom_call.1} parent=1 // loop_exit
      _
    %1669 = vsyncpa [#allocation3], 1
    %s1670 = scalar_lea.sflag [#allocation3], 1
    %1671 = vsyncpa %s1670, 1
    %1672 = vsyncpa [#allocation5], 1
    %s1673 = scalar_lea.sflag [#allocation5], 1
    %1674 = vsyncpa %s1673, 1

</llo_original>
